<compile_context>
chip_gen: v7x
topology: tpu7x:2x2x1
jax: 0.10.0
libtpu: 0.0.40
codegen_flags: <defaults>
</compile_context>

<pallas_src>
import math
import functools

import jax
import jax.numpy as jnp
from jax.experimental import pallas as pl
from jax.experimental.pallas import tpu as pltpu


LN_EPS = 1e-5
NEG_INF = -1e30


# ----------------------------- config ---------------------------------------
class GPTConfig:
    def __init__(self, vocab_size, block_size, n_layer, n_head, n_embd):
        self.vocab_size = vocab_size
        self.block_size = block_size
        self.n_layer = n_layer
        self.n_head = n_head
        self.n_embd = n_embd


def _layernorm(x, w, b):
    mu = jnp.mean(x, axis=-1, keepdims=True)
    var = jnp.mean((x - mu) ** 2, axis=-1, keepdims=True)
    return (x - mu) * jax.lax.rsqrt(var + LN_EPS) * w + b


def _gelu_tanh(x):
    # GPT-2 uses the tanh approximation of GELU
    return 0.5 * x * (1.0 + jnp.tanh(0.7978845608028654 * (x + 0.044715 * x * x * x)))


def _round_up(n, m):
    return (n + m - 1) // m * m


# --------------------------------------------------------------------------
# Kernel 1: all decoder blocks fused + final LayerNorm, grid = (batch_chunk, layer).
#   - layer weights streamed per grid step (double-buffered by the pipeline)
#   - f32 residual stream for the whole chunk resident in VMEM across layers
#   - output (ln_f(x), bf16) written only on the last layer
# --------------------------------------------------------------------------
def decoder_blocks_kernel(n_head, Bb,
                          x_ref,
                          ln1w_ref, ln1b_ref, wqkv_ref, bqkv_ref,
                          wproj_ref, bproj_ref,
                          ln2w_ref, ln2b_ref, wfc_ref, bfc_ref,
                          wfc2_ref, bfc2_ref,
                          lnfw_ref, lnfb_ref,
                          o_ref,
                          xres_ref, attn_ref):
    layer = pl.program_id(1)
    n_layer = pl.num_programs(1)
    bf16 = jnp.bfloat16
    f32 = jnp.float32

    M, C = xres_ref.shape            # M = Bb * T rows folded into the matmul M dim
    T = M // Bb
    hd = C // n_head
    scale = 1.0 / math.sqrt(hd)

    @pl.when(layer == 0)
    def _():
        xres_ref[...] = x_ref[...].reshape(M, C).astype(f32)

    x = xres_ref[...]                # (M, C) f32 residual stream

    # ---- ln1 + causal multi-head self-attention -----------------------------
    xl = _layernorm(x, ln1w_ref[0], ln1b_ref[0]).astype(bf16)
    qkv = jnp.dot(xl, wqkv_ref[0], preferred_element_type=f32) + bqkv_ref[0]
    q = qkv[:, 0 * C:1 * C].astype(bf16)
    k = qkv[:, 1 * C:2 * C].astype(bf16)
    v = qkv[:, 2 * C:3 * C].astype(bf16)

    row = jax.lax.broadcasted_iota(jnp.int32, (T, T), 0)
    col = jax.lax.broadcasted_iota(jnp.int32, (T, T), 1)
    causal = row >= col

    # Static loop over (batch row, head); each head's PV result is stored straight
    # into its lane offset of the bf16 VMEM scratch (no concatenate; one (T, T)
    # score matrix live at a time).
    for b in range(Bb):
        r0 = b * T
        for h in range(n_head):
            c0 = h * hd
            qh = q[r0:r0 + T, c0:c0 + hd]
            kh = k[r0:r0 + T, c0:c0 + hd]
            vh = v[r0:r0 + T, c0:c0 + hd]
            att = jax.lax.dot_general(qh, kh, (((1,), (1,)), ((), ())),
                                      preferred_element_type=f32) * scale
            att = jnp.where(causal, att, NEG_INF)
            att = att - jnp.max(att, axis=-1, keepdims=True)
            # bf16 exp (bf16 EUP path on v6e/v7x); row-sum kept in f32.
            p = jnp.exp(att.astype(bf16))
            denom = jnp.sum(p.astype(f32), axis=-1, keepdims=True)
            pv = jnp.dot(p, vh, preferred_element_type=f32)
            # normalize AFTER the PV matmul: (T, hd) multiply instead of (T, T)
            pv = pv * pl.reciprocal(denom, approx=True)
            attn_ref[r0:r0 + T, c0:c0 + hd] = pv.astype(bf16)

    y = jnp.dot(attn_ref[...], wproj_ref[0],
                preferred_element_type=f32) + bproj_ref[0]
    x = x + y

    # ---- ln2 + MLP (GELU tanh); the (M, 4C) hidden never leaves VMEM --------
    xl2 = _layernorm(x, ln2w_ref[0], ln2b_ref[0]).astype(bf16)
    h1 = jnp.dot(xl2, wfc_ref[0], preferred_element_type=f32) + bfc_ref[0]
    h1 = _gelu_tanh(h1).astype(bf16)         # GELU math f32, result stored bf16
    h2 = jnp.dot(h1, wfc2_ref[0], preferred_element_type=f32) + bfc2_ref[0]
    x = x + h2

    xres_ref[...] = x

    # ---- final layer: fuse ln_f and emit bf16 input for the lm head ---------
    @pl.when(layer == n_layer - 1)
    def _():
        xn = _layernorm(x, lnfw_ref[...], lnfb_ref[...])
        o_ref[...] = xn.reshape(Bb, T, C).astype(o_ref.dtype)


def run_decoder_blocks(x, params, n_head):
    B, T, C = x.shape
    L = params['w_qkv'].shape[0]
    assert C % n_head == 0, "n_embd must be divisible by n_head"

    # At most 2 batch chunks: one per megacore TensorCore; within a chunk the batch
    # rows are folded into the matmul M dim so weights are streamed once per chunk.
    NB = 2 if (B % 2 == 0 and B >= 2) else 1
    Bb = B // NB
    M = Bb * T

    xmap = lambda nb, l: (nb, 0, 0)
    wmap = lambda nb, l: (l, 0, 0)
    cmap = lambda nb, l: (0, 0)
    wspec = lambda shape: pl.BlockSpec(shape, wmap)

    # Rough per-step VMEM footprint -> vmem limit.  Clamped to 64 MiB so it is
    # always valid on v7x (64 MiB/TC); raise the cap to ~100 MiB on v5e/v6e for
    # real GPT-2 sizes.
    est = (2 * 12 * C * C * 2            # double-buffered bf16 matmul weights
           + 4 * M * C * 4               # residual scratch + qkv/attn temporaries
           + M * 4 * C * 4               # f32 MLP hidden before bf16 cast
           + 4 * T * T * 4)              # score matrices / masks
    vmem_limit = min(64 * 1024 * 1024, max(32 * 1024 * 1024, 2 * est))

    return pl.pallas_call(
        functools.partial(decoder_blocks_kernel, n_head, Bb),
        out_shape=jax.ShapeDtypeStruct((B, T, C), jnp.bfloat16),
        grid_spec=pltpu.PrefetchScalarGridSpec(
            num_scalar_prefetch=0,
            grid=(NB, L),                                   # layer = inner axis
            in_specs=[
                pl.BlockSpec((Bb, T, C), xmap),             # embeddings (per chunk)
                wspec((1, 1, C)), wspec((1, 1, C)),         # ln1 w, b
                wspec((1, C, 3 * C)), wspec((1, 1, 3 * C)),  # qkv
                wspec((1, C, C)), wspec((1, 1, C)),         # attn out proj
                wspec((1, 1, C)), wspec((1, 1, C)),         # ln2 w, b
                wspec((1, C, 4 * C)), wspec((1, 1, 4 * C)),  # mlp fc
                wspec((1, 4 * C, C)), wspec((1, 1, C)),     # mlp proj
                pl.BlockSpec((1, C), cmap),                 # ln_f w
                pl.BlockSpec((1, C), cmap),                 # ln_f b
            ],
            out_specs=pl.BlockSpec((Bb, T, C), xmap),
            scratch_shapes=[pltpu.VMEM((M, C), jnp.float32),    # residual stream
                            pltpu.VMEM((M, C), jnp.bfloat16)],  # attention output
        ),
        compiler_params=pltpu.CompilerParams(
            dimension_semantics=("parallel", "arbitrary"),
            vmem_limit_bytes=vmem_limit),
    )(x,
      params['ln1_w'], params['ln1_b'],
      params['w_qkv'], params['b_qkv'],
      params['w_aproj'], params['b_aproj'],
      params['ln2_w'], params['ln2_b'],
      params['w_fc'], params['b_fc'],
      params['w_mproj'], params['b_mproj'],
      params['lnf_w'], params['lnf_b'])


# --------------------------------------------------------------------------
# Kernel 2: tied lm head.  Grid = (vocab tiles OUTER, row tiles inner) so each
# lane-dense bf16 weight tile is streamed from HBM exactly once.  ln_f was
# already applied (fused into the decoder epilogue); the matmul contracts the
# last dims of (tm, C) x (tn, C), so no transpose anywhere.
# --------------------------------------------------------------------------
def lm_head_kernel(x_ref, w_ref, o_ref):
    o_ref[...] = jax.lax.dot_general(
        x_ref[...], w_ref[...], (((1,), (1,)), ((), ())),
        preferred_element_type=jnp.float32)


def run_lm_head(xn, wte):
    # xn: (B, T, C) bf16 (already ln_f-normalized); wte: (V, C) bf16 (tied weights)
    B, T, C = xn.shape
    V = wte.shape[0]
    BT = B * T

    tm = min(256, _round_up(BT, 8))
    tn = min(1024, _round_up(V, 128))
    BTp = _round_up(BT, tm)
    Vp = _round_up(V, tn)

    x2 = xn.reshape(BT, C)
    if BTp != BT:
        x2 = jnp.pad(x2, ((0, BTp - BT), (0, 0)))
    w = wte
    if Vp != V:
        w = jnp.pad(w, ((0, Vp - V), (0, 0)))

    out = pl.pallas_call(
        lm_head_kernel,
        out_shape=jax.ShapeDtypeStruct((BTp, Vp), jnp.float32),
        grid_spec=pltpu.PrefetchScalarGridSpec(
            num_scalar_prefetch=0,
            grid=(Vp // tn, BTp // tm),                    # vocab outer, rows inner
            in_specs=[
                pl.BlockSpec((tm, C), lambda j, i: (i, 0)),
                pl.BlockSpec((tn, C), lambda j, i: (j, 0)),  # resident across rows
            ],
            out_specs=pl.BlockSpec((tm, tn), lambda j, i: (i, j)),
        ),
        compiler_params=pltpu.CompilerParams(
            dimension_semantics=("parallel", "arbitrary")),
    )(x2, w)
    return out[:BT, :V].reshape(B, T, V)


# --------------------------------- forward -----------------------------------
def nano_gpt2_forward(idx, params, config):
    B, T = idx.shape
    assert T <= config.block_size
    # embedding gathers are glue (plain JAX)
    tok_emb = jnp.take(params['wte'], idx, axis=0).astype(jnp.float32)  # (B, T, C)
    pos_emb = params['wpe'][:T].astype(jnp.float32)                     # (T, C)
    x = tok_emb + pos_emb[None]
    xn = run_decoder_blocks(x, params, config.n_head)   # ln_f fused, bf16 output
    return run_lm_head(xn, params['wte'])


# ------------------------ parameter init ------------------------------------
def init_params(key, config):
    C = config.n_embd
    V = config.vocab_size
    L = config.n_layer
    std = 0.02
    proj_std = 0.02 * (2 * L) ** (-0.5)        # NANOGPT_SCALE_INIT

    ks = jax.random.split(key, 6)
    nrm = lambda k, shape, s: s * jax.random.normal(k, shape, jnp.float32)

    params = {
        # tied embedding / lm head: stored bf16 (MXU-native, halves lm-head HBM stream)
        'wte': nrm(ks[0], (V, C), std).astype(jnp.bfloat16),
        'wpe': nrm(ks[1], (config.block_size, C), std),
        'lnf_w': jnp.ones((1, C), jnp.float32),
        'lnf_b': jnp.zeros((1, C), jnp.float32),
        # per-layer params stacked on a leading layer axis, streamed by the kernel;
        # matmul weights stored bf16 (MXU native), norms/biases in f32.
        'ln1_w': jnp.ones((L, 1, C), jnp.float32),
        'ln1_b': jnp.zeros((L, 1, C), jnp.float32),
        'ln2_w': jnp.ones((L, 1, C), jnp.float32),
        'ln2_b': jnp.zeros((L, 1, C), jnp.float32),
        'w_qkv': nrm(ks[2], (L, C, 3 * C), std).astype(jnp.bfloat16),
        'b_qkv': jnp.zeros((L, 1, 3 * C), jnp.float32),
        'w_aproj': nrm(ks[3], (L, C, C), proj_std).astype(jnp.bfloat16),
        'b_aproj': jnp.zeros((L, 1, C), jnp.float32),
        'w_fc': nrm(ks[4], (L, C, 4 * C), std).astype(jnp.bfloat16),
        'b_fc': jnp.zeros((L, 1, 4 * C), jnp.float32),
        'w_mproj': nrm(ks[5], (L, 4 * C, C), proj_std).astype(jnp.bfloat16),
        'b_mproj': jnp.zeros((L, 1, C), jnp.float32),
    }
    return params


# ----------------------- pure-JAX reference ----------------------------------
def reference_forward(idx, params, config):
    B, T = idx.shape
    C = config.n_embd
    nh = config.n_head
    hd = C // nh
    f32 = jnp.float32

    wte = params['wte'].astype(f32)
    x = jnp.take(wte, idx, axis=0) + params['wpe'][:T][None]
    mask = jnp.tril(jnp.ones((T, T), bool))
    for l in range(config.n_layer):
        xl = _layernorm(x, params['ln1_w'][l], params['ln1_b'][l])
        qkv = xl @ params['w_qkv'][l].astype(f32) + params['b_qkv'][l]
        q, k, v = jnp.split(qkv, 3, axis=-1)
        q = q.reshape(B, T, nh, hd).transpose(0, 2, 1, 3)
        k = k.reshape(B, T, nh, hd).transpose(0, 2, 1, 3)
        v = v.reshape(B, T, nh, hd).transpose(0, 2, 1, 3)
        att = jnp.einsum('bhtd,bhsd->bhts', q, k) / math.sqrt(hd)
        att = jnp.where(mask[None, None], att, NEG_INF)
        p = jax.nn.softmax(att, axis=-1)
        y = jnp.einsum('bhts,bhsd->bhtd', p, v).transpose(0, 2, 1, 3).reshape(B, T, C)
        x = x + y @ params['w_aproj'][l].astype(f32) + params['b_aproj'][l]
        xl2 = _layernorm(x, params['ln2_w'][l], params['ln2_b'][l])
        h = _gelu_tanh(xl2 @ params['w_fc'][l].astype(f32) + params['b_fc'][l])
        x = x + h @ params['w_mproj'][l].astype(f32) + params['b_mproj'][l]
    xf = _layernorm(x, params['lnf_w'], params['lnf_b'])
    return xf @ wte.T


# --------------------------------- main --------------------------------------
if __name__ == "__main__":
    config = GPTConfig(vocab_size=512, block_size=32, n_layer=2, n_head=4, n_embd=64)
    B, T = 2, 16

    key = jax.random.PRNGKey(0)
    key_p, key_idx = jax.random.split(key)
    params = init_params(key_p, config)
    idx = jax.random.randint(key_idx, (B, T), 0, config.vocab_size, dtype=jnp.int32)

    fwd = jax.jit(functools.partial(nano_gpt2_forward, config=config))
    logits = jax.block_until_ready(fwd(idx, params))

    ref = reference_forward(idx, params, config)
    assert logits.shape == (B, T, config.vocab_size)
    max_err = float(jnp.max(jnp.abs(logits - ref)))
    assert jnp.allclose(logits, ref, atol=1e-2, rtol=1e-2), \
        f"mismatch vs reference (max abs err {max_err})"

    print("KERNEL_OK")
</pallas_src>

<mosaic_0001>
module attributes {stable_mosaic.version = 11 : i64} {
  func.func @lm_head_kernel(%arg0: i32, %arg1: i32, %arg2: memref<32x64xbf16, #tpu.memory_space<vmem>>, %arg3: memref<512x64xbf16, #tpu.memory_space<vmem>>, %arg4: memref<32x512xf32, #tpu.memory_space<vmem>>) attributes {dimension_semantics = [#tpu.dimension_semantics<parallel>, #tpu.dimension_semantics<arbitrary>], iteration_bounds = array<i64: 1, 1>, scalar_prefetch = 0 : i64, scratch_operands = 0 : i64, tpu.core_type = #tpu.core_type<tc>, window_params = [{transform_indices = @transform_0, window_bounds = array<i64: 32, 64>}, {transform_indices = @transform_1, window_bounds = array<i64: 512, 64>}, {transform_indices = @transform_2, window_bounds = array<i64: 32, 512>}]} {
    %c0 = arith.constant 0 : index
    %c0_0 = arith.constant 0 : index
    %0 = vector.load %arg2[%c0, %c0_0] : memref<32x64xbf16, #tpu.memory_space<vmem>>, vector<32x64xbf16>
    %c0_1 = arith.constant 0 : index
    %c0_2 = arith.constant 0 : index
    %1 = vector.load %arg3[%c0_1, %c0_2] : memref<512x64xbf16, #tpu.memory_space<vmem>>, vector<512x64xbf16>
    %cst = arith.constant dense<0.000000e+00> : vector<32x512xf32>
    %2 = tpu.matmul %0, %1, %cst {dimension_numbers = #tpu.dot_dimension_numbers<[1], [1], [0], [0], [0, 0, 1, 0], [], []>} : vector<32x64xbf16>, vector<512x64xbf16>, vector<32x512xf32> -> vector<32x512xf32>
    %c0_3 = arith.constant 0 : index
    %c0_4 = arith.constant 0 : index
    %3 = vector.load %arg4[%c0_3, %c0_4] : memref<32x512xf32, #tpu.memory_space<vmem>>, vector<32x512xf32>
    tpu.vector_store %arg4[%c0_3, %c0_4], %2 {strides = array<i32>} : memref<32x512xf32, #tpu.memory_space<vmem>>, vector<32x512xf32>,
    return
  }
  func.func @transform_0(%arg0: i32, %arg1: i32) -> (i32, i32) {
    %c0_i32 = arith.constant 0 : i32
    %c0_i32_0 = arith.constant 0 : i32
    return %arg1, %c0_i32 : i32, i32
  }
  func.func @transform_1(%arg0: i32, %arg1: i32) -> (i32, i32) {
    %c0_i32 = arith.constant 0 : i32
    %c0_i32_0 = arith.constant 0 : i32
    return %arg0, %c0_i32 : i32, i32
  }
  func.func @transform_2(%arg0: i32, %arg1: i32) -> (i32, i32) {
    %c0_i32 = arith.constant 0 : i32
    return %arg1, %arg0 : i32, i32
  }
}

module attributes {stable_mosaic.version = 11 : i64} {
  func.func @decoder_blocks_kernel(%arg0: i32, %arg1: i32, %arg2: memref<1x16x64xf32, #tpu.memory_space<vmem>>, %arg3: memref<1x1x64xf32, #tpu.memory_space<vmem>>, %arg4: memref<1x1x64xf32, #tpu.memory_space<vmem>>, %arg5: memref<1x64x192xbf16, #tpu.memory_space<vmem>>, %arg6: memref<1x1x192xf32, #tpu.memory_space<vmem>>, %arg7: memref<1x64x64xbf16, #tpu.memory_space<vmem>>, %arg8: memref<1x1x64xf32, #tpu.memory_space<vmem>>, %arg9: memref<1x1x64xf32, #tpu.memory_space<vmem>>, %arg10: memref<1x1x64xf32, #tpu.memory_space<vmem>>, %arg11: memref<1x64x256xbf16, #tpu.memory_space<vmem>>, %arg12: memref<1x1x256xf32, #tpu.memory_space<vmem>>, %arg13: memref<1x256x64xbf16, #tpu.memory_space<vmem>>, %arg14: memref<1x1x64xf32, #tpu.memory_space<vmem>>, %arg15: memref<1x64xf32, #tpu.memory_space<vmem>>, %arg16: memref<1x64xf32, #tpu.memory_space<vmem>>, %arg17: memref<1x16x64xbf16, #tpu.memory_space<vmem>>, %arg18: memref<16x64xf32, #tpu.memory_space<vmem>>, %arg19: memref<16x64xbf16, #tpu.memory_space<vmem>>) attributes {dimension_semantics = [#tpu.dimension_semantics<parallel>, #tpu.dimension_semantics<arbitrary>], iteration_bounds = array<i64: 2, 2>, scalar_prefetch = 0 : i64, scratch_operands = 2 : i64, tpu.core_type = #tpu.core_type<tc>, window_params = [{transform_indices = @transform_0, window_bounds = array<i64: 1, 16, 64>}, {transform_indices = @transform_1, window_bounds = array<i64: 1, 1, 64>}, {transform_indices = @transform_2, window_bounds = array<i64: 1, 1, 64>}, {transform_indices = @transform_3, window_bounds = array<i64: 1, 64, 192>}, {transform_indices = @transform_4, window_bounds = array<i64: 1, 1, 192>}, {transform_indices = @transform_5, window_bounds = array<i64: 1, 64, 64>}, {transform_indices = @transform_6, window_bounds = array<i64: 1, 1, 64>}, {transform_indices = @transform_7, window_bounds = array<i64: 1, 1, 64>}, {transform_indices = @transform_8, window_bounds = array<i64: 1, 1, 64>}, {transform_indices = @transform_9, window_bounds = array<i64: 1, 64, 256>}, {transform_indices = @transform_10, window_bounds = array<i64: 1, 1, 256>}, {transform_indices = @transform_11, window_bounds = array<i64: 1, 256, 64>}, {transform_indices = @transform_12, window_bounds = array<i64: 1, 1, 64>}, {pipeline_mode = #tpu.pipeline_mode<synchronous>, transform_indices = @transform_13, window_bounds = array<i64: 1, 64>}, {pipeline_mode = #tpu.pipeline_mode<synchronous>, transform_indices = @transform_14, window_bounds = array<i64: 1, 64>}, {transform_indices = @transform_15, window_bounds = array<i64: 1, 16, 64>}]} {
    %c0_i32 = arith.constant 0 : i32
    %0 = arith.cmpi eq, %arg1, %c0_i32 : i32
    %1 = arith.extui %0 : i1 to i32
    %c0_i32_0 = arith.constant 0 : i32
    %2 = arith.cmpi ne, %1, %c0_i32_0 : i32
    scf.if %2 {
      %c0_89 = arith.constant 0 : index
      %c0_90 = arith.constant 0 : index
      %c0_91 = arith.constant 0 : index
      %208 = vector.load %arg2[%c0_89, %c0_90, %c0_91] : memref<1x16x64xf32, #tpu.memory_space<vmem>>, vector<1x16x64xf32>
      %209 = vector.shape_cast %208 : vector<1x16x64xf32> to vector<16x64xf32>
      %c0_92 = arith.constant 0 : index
      %c0_93 = arith.constant 0 : index
      %210 = vector.load %arg18[%c0_92, %c0_93] : memref<16x64xf32, #tpu.memory_space<vmem>>, vector<16x64xf32>
      tpu.vector_store %arg18[%c0_92, %c0_93], %209 {strides = array<i32>} : memref<16x64xf32, #tpu.memory_space<vmem>>, vector<16x64xf32>,
    } else {
    }
    %c0 = arith.constant 0 : index
    %c0_1 = arith.constant 0 : index
    %3 = vector.load %arg18[%c0, %c0_1] : memref<16x64xf32, #tpu.memory_space<vmem>>, vector<16x64xf32>
    %c0_2 = arith.constant 0 : index
    %c0_3 = arith.constant 0 : index
    %c0_4 = arith.constant 0 : index
    %4 = vector.load %arg3[%c0_2, %c0_3, %c0_4] : memref<1x1x64xf32, #tpu.memory_space<vmem>>, vector<1x1x64xf32>
    %5 = vector.shape_cast %4 : vector<1x1x64xf32> to vector<1x64xf32>
    %c0_5 = arith.constant 0 : index
    %c0_6 = arith.constant 0 : index
    %c0_7 = arith.constant 0 : index
    %6 = vector.load %arg4[%c0_5, %c0_6, %c0_7] : memref<1x1x64xf32, #tpu.memory_space<vmem>>, vector<1x1x64xf32>
    %7 = vector.shape_cast %6 : vector<1x1x64xf32> to vector<1x64xf32>
    %cst = arith.constant dense<0.000000e+00> : vector<16xf32>
    %8 = vector.multi_reduction <add>, %3, %cst [1] : vector<16x64xf32> to vector<16xf32>
    %9 = vector.shape_cast %8 : vector<16xf32> to vector<16x1xf32>
    %cst_8 = arith.constant 6.400000e+01 : f32
    %10 = vector.broadcast %cst_8 : f32 to vector<16x1xf32>
    %11 = arith.divf %9, %10 : vector<16x1xf32>
    %12 = vector.broadcast %11 : vector<16x1xf32> to vector<16x64xf32>
    %13 = arith.subf %3, %12 : vector<16x64xf32>
    %14 = arith.mulf %13, %13 : vector<16x64xf32>
    %cst_9 = arith.constant dense<0.000000e+00> : vector<16xf32>
    %15 = vector.multi_reduction <add>, %14, %cst_9 [1] : vector<16x64xf32> to vector<16xf32>
    %16 = vector.shape_cast %15 : vector<16xf32> to vector<16x1xf32>
    %cst_10 = arith.constant 6.400000e+01 : f32
    %17 = vector.broadcast %cst_10 : f32 to vector<16x1xf32>
    %18 = arith.divf %16, %17 : vector<16x1xf32>
    %19 = vector.broadcast %11 : vector<16x1xf32> to vector<16x64xf32>
    %20 = arith.subf %3, %19 : vector<16x64xf32>
    %cst_11 = arith.constant 9.99999974E-6 : f32
    %21 = vector.broadcast %cst_11 : f32 to vector<16x1xf32>
    %22 = arith.addf %18, %21 : vector<16x1xf32>
    %23 = math.rsqrt %22 : vector<16x1xf32>
    %24 = vector.broadcast %23 : vector<16x1xf32> to vector<16x64xf32>
    %25 = arith.mulf %20, %24 : vector<16x64xf32>
    %26 = vector.broadcast %5 : vector<1x64xf32> to vector<16x64xf32>
    %27 = arith.mulf %25, %26 : vector<16x64xf32>
    %28 = vector.broadcast %7 : vector<1x64xf32> to vector<16x64xf32>
    %29 = arith.addf %27, %28 : vector<16x64xf32>
    %30 = arith.truncf %29 : vector<16x64xf32> to vector<16x64xbf16>
    %c0_12 = arith.constant 0 : index
    %c0_13 = arith.constant 0 : index
    %c0_14 = arith.constant 0 : index
    %31 = vector.load %arg5[%c0_12, %c0_13, %c0_14] : memref<1x64x192xbf16, #tpu.memory_space<vmem>>, vector<1x64x192xbf16>
    %32 = vector.shape_cast %31 : vector<1x64x192xbf16> to vector<64x192xbf16>
    %cst_15 = arith.constant dense<0.000000e+00> : vector<16x192xf32>
    %33 = tpu.matmul %30, %32, %cst_15 {dimension_numbers = #tpu.dot_dimension_numbers<[1], [0], [0], [1], [0, 0, 1, 1], [], []>} : vector<16x64xbf16>, vector<64x192xbf16>, vector<16x192xf32> -> vector<16x192xf32>
    %c0_16 = arith.constant 0 : index
    %c0_17 = arith.constant 0 : index
    %c0_18 = arith.constant 0 : index
    %34 = vector.load %arg6[%c0_16, %c0_17, %c0_18] : memref<1x1x192xf32, #tpu.memory_space<vmem>>, vector<1x1x192xf32>
    %35 = vector.shape_cast %34 : vector<1x1x192xf32> to vector<1x192xf32>
    %36 = vector.broadcast %35 : vector<1x192xf32> to vector<16x192xf32>
    %37 = arith.addf %33, %36 : vector<16x192xf32>
    %38 = vector.extract_strided_slice %37 {offsets = [0, 0], sizes = [16, 64], strides = [1, 1]} : vector<16x192xf32> to vector<16x64xf32>
    %39 = arith.truncf %38 : vector<16x64xf32> to vector<16x64xbf16>
    %40 = vector.extract_strided_slice %37 {offsets = [0, 64], sizes = [16, 64], strides = [1, 1]} : vector<16x192xf32> to vector<16x64xf32>
    %41 = arith.truncf %40 : vector<16x64xf32> to vector<16x64xbf16>
    %42 = vector.extract_strided_slice %37 {offsets = [0, 128], sizes = [16, 64], strides = [1, 1]} : vector<16x192xf32> to vector<16x64xf32>
    %43 = arith.truncf %42 : vector<16x64xf32> to vector<16x64xbf16>
    %44 = tpu.iota {dimensions = array<i32: 0>} : vector<16x16xi32>
    %45 = tpu.iota {dimensions = array<i32: 1>} : vector<16x16xi32>
    %46 = arith.cmpi sge, %44, %45 : vector<16x16xi32>
    %47 = vector.extract_strided_slice %39 {offsets = [0, 0], sizes = [16, 16], strides = [1, 1]} : vector<16x64xbf16> to vector<16x16xbf16>
    %48 = vector.extract_strided_slice %41 {offsets = [0, 0], sizes = [16, 16], strides = [1, 1]} : vector<16x64xbf16> to vector<16x16xbf16>
    %49 = vector.extract_strided_slice %43 {offsets = [0, 0], sizes = [16, 16], strides = [1, 1]} : vector<16x64xbf16> to vector<16x16xbf16>
    %cst_19 = arith.constant dense<0.000000e+00> : vector<16x16xf32>
    %50 = tpu.matmul %47, %48, %cst_19 {dimension_numbers = #tpu.dot_dimension_numbers<[1], [1], [0], [0], [0, 0, 1, 0], [], []>} : vector<16x16xbf16>, vector<16x16xbf16>, vector<16x16xf32> -> vector<16x16xf32>
    %cst_20 = arith.constant 2.500000e-01 : f32
    %51 = vector.broadcast %cst_20 : f32 to vector<16x16xf32>
    %52 = arith.mulf %50, %51 : vector<16x16xf32>
    %cst_21 = arith.constant -1.000000e+30 : f32
    %53 = vector.broadcast %cst_21 : f32 to vector<16x16xf32>
    %54 = arith.select %46, %52, %53 : vector<16x16xi1>, vector<16x16xf32>
    %cst_22 = arith.constant dense<0xFF800000> : vector<16xf32>
    %55 = vector.multi_reduction <maximumf>, %54, %cst_22 [1] : vector<16x16xf32> to vector<16xf32>
    %56 = vector.shape_cast %55 : vector<16xf32> to vector<16x1xf32>
    %57 = vector.broadcast %56 : vector<16x1xf32> to vector<16x16xf32>
    %58 = arith.subf %54, %57 : vector<16x16xf32>
    %59 = arith.truncf %58 : vector<16x16xf32> to vector<16x16xbf16>
    %60 = math.exp %59 : vector<16x16xbf16>
    %61 = arith.extf %60 : vector<16x16xbf16> to vector<16x16xf32>
    %cst_23 = arith.constant dense<0.000000e+00> : vector<16xf32>
    %62 = vector.multi_reduction <add>, %61, %cst_23 [1] : vector<16x16xf32> to vector<16xf32>
    %63 = vector.shape_cast %62 : vector<16xf32> to vector<16x1xf32>
    %cst_24 = arith.constant dense<0.000000e+00> : vector<16x16xf32>
    %64 = tpu.matmul %60, %49, %cst_24 {dimension_numbers = #tpu.dot_dimension_numbers<[1], [0], [0], [1], [0, 0, 1, 1], [], []>} : vector<16x16xbf16>, vector<16x16xbf16>, vector<16x16xf32> -> vector<16x16xf32>
    %65 = tpu.reciprocal %63 {approx = true} : vector<16x1xf32> -> vector<16x1xf32>
    %66 = vector.broadcast %65 : vector<16x1xf32> to vector<16x16xf32>
    %67 = arith.mulf %64, %66 : vector<16x16xf32>
    %68 = arith.truncf %67 : vector<16x16xf32> to vector<16x16xbf16>
    %c0_25 = arith.constant 0 : index
    %c0_26 = arith.constant 0 : index
    %69 = vector.load %arg19[%c0_25, %c0_26] : memref<16x64xbf16, #tpu.memory_space<vmem>>, vector<16x16xbf16>
    tpu.vector_store %arg19[%c0_25, %c0_26], %68 {strides = array<i32>} : memref<16x64xbf16, #tpu.memory_space<vmem>>, vector<16x16xbf16>,
    %70 = vector.extract_strided_slice %39 {offsets = [0, 16], sizes = [16, 16], strides = [1, 1]} : vector<16x64xbf16> to vector<16x16xbf16>
    %71 = vector.extract_strided_slice %41 {offsets = [0, 16], sizes = [16, 16], strides = [1, 1]} : vector<16x64xbf16> to vector<16x16xbf16>
    %72 = vector.extract_strided_slice %43 {offsets = [0, 16], sizes = [16, 16], strides = [1, 1]} : vector<16x64xbf16> to vector<16x16xbf16>
    %cst_27 = arith.constant dense<0.000000e+00> : vector<16x16xf32>
    %73 = tpu.matmul %70, %71, %cst_27 {dimension_numbers = #tpu.dot_dimension_numbers<[1], [1], [0], [0], [0, 0, 1, 0], [], []>} : vector<16x16xbf16>, vector<16x16xbf16>, vector<16x16xf32> -> vector<16x16xf32>
    %cst_28 = arith.constant 2.500000e-01 : f32
    %74 = vector.broadcast %cst_28 : f32 to vector<16x16xf32>
    %75 = arith.mulf %73, %74 : vector<16x16xf32>
    %cst_29 = arith.constant -1.000000e+30 : f32
    %76 = vector.broadcast %cst_29 : f32 to vector<16x16xf32>
    %77 = arith.select %46, %75, %76 : vector<16x16xi1>, vector<16x16xf32>
    %cst_30 = arith.constant dense<0xFF800000> : vector<16xf32>
    %78 = vector.multi_reduction <maximumf>, %77, %cst_30 [1] : vector<16x16xf32> to vector<16xf32>
    %79 = vector.shape_cast %78 : vector<16xf32> to vector<16x1xf32>
    %80 = vector.broadcast %79 : vector<16x1xf32> to vector<16x16xf32>
    %81 = arith.subf %77, %80 : vector<16x16xf32>
    %82 = arith.truncf %81 : vector<16x16xf32> to vector<16x16xbf16>
    %83 = math.exp %82 : vector<16x16xbf16>
    %84 = arith.extf %83 : vector<16x16xbf16> to vector<16x16xf32>
    %cst_31 = arith.constant dense<0.000000e+00> : vector<16xf32>
    %85 = vector.multi_reduction <add>, %84, %cst_31 [1] : vector<16x16xf32> to vector<16xf32>
    %86 = vector.shape_cast %85 : vector<16xf32> to vector<16x1xf32>
    %cst_32 = arith.constant dense<0.000000e+00> : vector<16x16xf32>
    %87 = tpu.matmul %83, %72, %cst_32 {dimension_numbers = #tpu.dot_dimension_numbers<[1], [0], [0], [1], [0, 0, 1, 1], [], []>} : vector<16x16xbf16>, vector<16x16xbf16>, vector<16x16xf32> -> vector<16x16xf32>
    %88 = tpu.reciprocal %86 {approx = true} : vector<16x1xf32> -> vector<16x1xf32>
    %89 = vector.broadcast %88 : vector<16x1xf32> to vector<16x16xf32>
    %90 = arith.mulf %87, %89 : vector<16x16xf32>
    %91 = arith.truncf %90 : vector<16x16xf32> to vector<16x16xbf16>
    %c0_33 = arith.constant 0 : index
    %c16 = arith.constant 16 : index
    %92 = vector.load %arg19[%c0_33, %c16] : memref<16x64xbf16, #tpu.memory_space<vmem>>, vector<16x16xbf16>
    tpu.vector_store %arg19[%c0_33, %c16], %91 {strides = array<i32>} : memref<16x64xbf16, #tpu.memory_space<vmem>>, vector<16x16xbf16>,
    %93 = vector.extract_strided_slice %39 {offsets = [0, 32], sizes = [16, 16], strides = [1, 1]} : vector<16x64xbf16> to vector<16x16xbf16>
    %94 = vector.extract_strided_slice %41 {offsets = [0, 32], sizes = [16, 16], strides = [1, 1]} : vector<16x64xbf16> to vector<16x16xbf16>
    %95 = vector.extract_strided_slice %43 {offsets = [0, 32], sizes = [16, 16], strides = [1, 1]} : vector<16x64xbf16> to vector<16x16xbf16>
    %cst_34 = arith.constant dense<0.000000e+00> : vector<16x16xf32>
    %96 = tpu.matmul %93, %94, %cst_34 {dimension_numbers = #tpu.dot_dimension_numbers<[1], [1], [0], [0], [0, 0, 1, 0], [], []>} : vector<16x16xbf16>, vector<16x16xbf16>, vector<16x16xf32> -> vector<16x16xf32>
    %cst_35 = arith.constant 2.500000e-01 : f32
    %97 = vector.broadcast %cst_35 : f32 to vector<16x16xf32>
    %98 = arith.mulf %96, %97 : vector<16x16xf32>
    %cst_36 = arith.constant -1.000000e+30 : f32
    %99 = vector.broadcast %cst_36 : f32 to vector<16x16xf32>
    %100 = arith.select %46, %98, %99 : vector<16x16xi1>, vector<16x16xf32>
    %cst_37 = arith.constant dense<0xFF800000> : vector<16xf32>
    %101 = vector.multi_reduction <maximumf>, %100, %cst_37 [1] : vector<16x16xf32> to vector<16xf32>
    %102 = vector.shape_cast %101 : vector<16xf32> to vector<16x1xf32>
    %103 = vector.broadcast %102 : vector<16x1xf32> to vector<16x16xf32>
    %104 = arith.subf %100, %103 : vector<16x16xf32>
    %105 = arith.truncf %104 : vector<16x16xf32> to vector<16x16xbf16>
    %106 = math.exp %105 : vector<16x16xbf16>
    %107 = arith.extf %106 : vector<16x16xbf16> to vector<16x16xf32>
    %cst_38 = arith.constant dense<0.000000e+00> : vector<16xf32>
    %108 = vector.multi_reduction <add>, %107, %cst_38 [1] : vector<16x16xf32> to vector<16xf32>
    %109 = vector.shape_cast %108 : vector<16xf32> to vector<16x1xf32>
    %cst_39 = arith.constant dense<0.000000e+00> : vector<16x16xf32>
    %110 = tpu.matmul %106, %95, %cst_39 {dimension_numbers = #tpu.dot_dimension_numbers<[1], [0], [0], [1], [0, 0, 1, 1], [], []>} : vector<16x16xbf16>, vector<16x16xbf16>, vector<16x16xf32> -> vector<16x16xf32>
    %111 = tpu.reciprocal %109 {approx = true} : vector<16x1xf32> -> vector<16x1xf32>
    %112 = vector.broadcast %111 : vector<16x1xf32> to vector<16x16xf32>
    %113 = arith.mulf %110, %112 : vector<16x16xf32>
    %114 = arith.truncf %113 : vector<16x16xf32> to vector<16x16xbf16>
    %c0_40 = arith.constant 0 : index
    %c32 = arith.constant 32 : index
    %115 = vector.load %arg19[%c0_40, %c32] : memref<16x64xbf16, #tpu.memory_space<vmem>>, vector<16x16xbf16>
    tpu.vector_store %arg19[%c0_40, %c32], %114 {strides = array<i32>} : memref<16x64xbf16, #tpu.memory_space<vmem>>, vector<16x16xbf16>,
    %116 = vector.extract_strided_slice %39 {offsets = [0, 48], sizes = [16, 16], strides = [1, 1]} : vector<16x64xbf16> to vector<16x16xbf16>
    %117 = vector.extract_strided_slice %41 {offsets = [0, 48], sizes = [16, 16], strides = [1, 1]} : vector<16x64xbf16> to vector<16x16xbf16>
    %118 = vector.extract_strided_slice %43 {offsets = [0, 48], sizes = [16, 16], strides = [1, 1]} : vector<16x64xbf16> to vector<16x16xbf16>
    %cst_41 = arith.constant dense<0.000000e+00> : vector<16x16xf32>
    %119 = tpu.matmul %116, %117, %cst_41 {dimension_numbers = #tpu.dot_dimension_numbers<[1], [1], [0], [0], [0, 0, 1, 0], [], []>} : vector<16x16xbf16>, vector<16x16xbf16>, vector<16x16xf32> -> vector<16x16xf32>
    %cst_42 = arith.constant 2.500000e-01 : f32
    %120 = vector.broadcast %cst_42 : f32 to vector<16x16xf32>
    %121 = arith.mulf %119, %120 : vector<16x16xf32>
    %cst_43 = arith.constant -1.000000e+30 : f32
    %122 = vector.broadcast %cst_43 : f32 to vector<16x16xf32>
    %123 = arith.select %46, %121, %122 : vector<16x16xi1>, vector<16x16xf32>
    %cst_44 = arith.constant dense<0xFF800000> : vector<16xf32>
    %124 = vector.multi_reduction <maximumf>, %123, %cst_44 [1] : vector<16x16xf32> to vector<16xf32>
    %125 = vector.shape_cast %124 : vector<16xf32> to vector<16x1xf32>
    %126 = vector.broadcast %125 : vector<16x1xf32> to vector<16x16xf32>
    %127 = arith.subf %123, %126 : vector<16x16xf32>
    %128 = arith.truncf %127 : vector<16x16xf32> to vector<16x16xbf16>
    %129 = math.exp %128 : vector<16x16xbf16>
    %130 = arith.extf %129 : vector<16x16xbf16> to vector<16x16xf32>
    %cst_45 = arith.constant dense<0.000000e+00> : vector<16xf32>
    %131 = vector.multi_reduction <add>, %130, %cst_45 [1] : vector<16x16xf32> to vector<16xf32>
    %132 = vector.shape_cast %131 : vector<16xf32> to vector<16x1xf32>
    %cst_46 = arith.constant dense<0.000000e+00> : vector<16x16xf32>
    %133 = tpu.matmul %129, %118, %cst_46 {dimension_numbers = #tpu.dot_dimension_numbers<[1], [0], [0], [1], [0, 0, 1, 1], [], []>} : vector<16x16xbf16>, vector<16x16xbf16>, vector<16x16xf32> -> vector<16x16xf32>
    %134 = tpu.reciprocal %132 {approx = true} : vector<16x1xf32> -> vector<16x1xf32>
    %135 = vector.broadcast %134 : vector<16x1xf32> to vector<16x16xf32>
    %136 = arith.mulf %133, %135 : vector<16x16xf32>
    %137 = arith.truncf %136 : vector<16x16xf32> to vector<16x16xbf16>
    %c0_47 = arith.constant 0 : index
    %c48 = arith.constant 48 : index
    %138 = vector.load %arg19[%c0_47, %c48] : memref<16x64xbf16, #tpu.memory_space<vmem>>, vector<16x16xbf16>
    tpu.vector_store %arg19[%c0_47, %c48], %137 {strides = array<i32>} : memref<16x64xbf16, #tpu.memory_space<vmem>>, vector<16x16xbf16>,
    %c0_48 = arith.constant 0 : index
    %c0_49 = arith.constant 0 : index
    %139 = vector.load %arg19[%c0_48, %c0_49] : memref<16x64xbf16, #tpu.memory_space<vmem>>, vector<16x64xbf16>
    %c0_50 = arith.constant 0 : index
    %c0_51 = arith.constant 0 : index
    %c0_52 = arith.constant 0 : index
    %140 = vector.load %arg7[%c0_50, %c0_51, %c0_52] : memref<1x64x64xbf16, #tpu.memory_space<vmem>>, vector<1x64x64xbf16>
    %141 = vector.shape_cast %140 : vector<1x64x64xbf16> to vector<64x64xbf16>
    %cst_53 = arith.constant dense<0.000000e+00> : vector<16x64xf32>
    %142 = tpu.matmul %139, %141, %cst_53 {dimension_numbers = #tpu.dot_dimension_numbers<[1], [0], [0], [1], [0, 0, 1, 1], [], []>} : vector<16x64xbf16>, vector<64x64xbf16>, vector<16x64xf32> -> vector<16x64xf32>
    %c0_54 = arith.constant 0 : index
    %c0_55 = arith.constant 0 : index
    %c0_56 = arith.constant 0 : index
    %143 = vector.load %arg8[%c0_54, %c0_55, %c0_56] : memref<1x1x64xf32, #tpu.memory_space<vmem>>, vector<1x1x64xf32>
    %144 = vector.shape_cast %143 : vector<1x1x64xf32> to vector<1x64xf32>
    %145 = vector.broadcast %144 : vector<1x64xf32> to vector<16x64xf32>
    %146 = arith.addf %142, %145 : vector<16x64xf32>
    %147 = arith.addf %3, %146 : vector<16x64xf32>
    %c0_57 = arith.constant 0 : index
    %c0_58 = arith.constant 0 : index
    %c0_59 = arith.constant 0 : index
    %148 = vector.load %arg9[%c0_57, %c0_58, %c0_59] : memref<1x1x64xf32, #tpu.memory_space<vmem>>, vector<1x1x64xf32>
    %149 = vector.shape_cast %148 : vector<1x1x64xf32> to vector<1x64xf32>
    %c0_60 = arith.constant 0 : index
    %c0_61 = arith.constant 0 : index
    %c0_62 = arith.constant 0 : index
    %150 = vector.load %arg10[%c0_60, %c0_61, %c0_62] : memref<1x1x64xf32, #tpu.memory_space<vmem>>, vector<1x1x64xf32>
    %151 = vector.shape_cast %150 : vector<1x1x64xf32> to vector<1x64xf32>
    %cst_63 = arith.constant dense<0.000000e+00> : vector<16xf32>
    %152 = vector.multi_reduction <add>, %147, %cst_63 [1] : vector<16x64xf32> to vector<16xf32>
    %153 = vector.shape_cast %152 : vector<16xf32> to vector<16x1xf32>
    %cst_64 = arith.constant 6.400000e+01 : f32
    %154 = vector.broadcast %cst_64 : f32 to vector<16x1xf32>
    %155 = arith.divf %153, %154 : vector<16x1xf32>
    %156 = vector.broadcast %155 : vector<16x1xf32> to vector<16x64xf32>
    %157 = arith.subf %147, %156 : vector<16x64xf32>
    %158 = arith.mulf %157, %157 : vector<16x64xf32>
    %cst_65 = arith.constant dense<0.000000e+00> : vector<16xf32>
    %159 = vector.multi_reduction <add>, %158, %cst_65 [1] : vector<16x64xf32> to vector<16xf32>
    %160 = vector.shape_cast %159 : vector<16xf32> to vector<16x1xf32>
    %cst_66 = arith.constant 6.400000e+01 : f32
    %161 = vector.broadcast %cst_66 : f32 to vector<16x1xf32>
    %162 = arith.divf %160, %161 : vector<16x1xf32>
    %163 = vector.broadcast %155 : vector<16x1xf32> to vector<16x64xf32>
    %164 = arith.subf %147, %163 : vector<16x64xf32>
    %cst_67 = arith.constant 9.99999974E-6 : f32
    %165 = vector.broadcast %cst_67 : f32 to vector<16x1xf32>
    %166 = arith.addf %162, %165 : vector<16x1xf32>
    %167 = math.rsqrt %166 : vector<16x1xf32>
    %168 = vector.broadcast %167 : vector<16x1xf32> to vector<16x64xf32>
    %169 = arith.mulf %164, %168 : vector<16x64xf32>
    %170 = vector.broadcast %149 : vector<1x64xf32> to vector<16x64xf32>
    %171 = arith.mulf %169, %170 : vector<16x64xf32>
    %172 = vector.broadcast %151 : vector<1x64xf32> to vector<16x64xf32>
    %173 = arith.addf %171, %172 : vector<16x64xf32>
    %174 = arith.truncf %173 : vector<16x64xf32> to vector<16x64xbf16>
    %c0_68 = arith.constant 0 : index
    %c0_69 = arith.constant 0 : index
    %c0_70 = arith.constant 0 : index
    %175 = vector.load %arg11[%c0_68, %c0_69, %c0_70] : memref<1x64x256xbf16, #tpu.memory_space<vmem>>, vector<1x64x256xbf16>
    %176 = vector.shape_cast %175 : vector<1x64x256xbf16> to vector<64x256xbf16>
    %cst_71 = arith.constant dense<0.000000e+00> : vector<16x256xf32>
    %177 = tpu.matmul %174, %176, %cst_71 {dimension_numbers = #tpu.dot_dimension_numbers<[1], [0], [0], [1], [0, 0, 1, 1], [], []>} : vector<16x64xbf16>, vector<64x256xbf16>, vector<16x256xf32> -> vector<16x256xf32>
    %c0_72 = arith.constant 0 : index
    %c0_73 = arith.constant 0 : index
    %c0_74 = arith.constant 0 : index
    %178 = vector.load %arg12[%c0_72, %c0_73, %c0_74] : memref<1x1x256xf32, #tpu.memory_space<vmem>>, vector<1x1x256xf32>
    %179 = vector.shape_cast %178 : vector<1x1x256xf32> to vector<1x256xf32>
    %180 = vector.broadcast %179 : vector<1x256xf32> to vector<16x256xf32>
    %181 = arith.addf %177, %180 : vector<16x256xf32>
    %cst_75 = arith.constant 5.000000e-01 : f32
    %182 = vector.broadcast %cst_75 : f32 to vector<16x256xf32>
    %183 = arith.mulf %182, %181 : vector<16x256xf32>
    %cst_76 = arith.constant 4.471500e-02 : f32
    %184 = vector.broadcast %cst_76 : f32 to vector<16x256xf32>
    %185 = arith.mulf %184, %181 : vector<16x256xf32>
    %186 = arith.mulf %185, %181 : vector<16x256xf32>
    %187 = arith.mulf %186, %181 : vector<16x256xf32>
    %188 = arith.addf %181, %187 : vector<16x256xf32>
    %cst_77 = arith.constant 0.797884583 : f32
    %189 = vector.broadcast %cst_77 : f32 to vector<16x256xf32>
    %190 = arith.mulf %189, %188 : vector<16x256xf32>
    %191 = math.tanh %190 : vector<16x256xf32>
    %cst_78 = arith.constant 1.000000e+00 : f32
    %192 = vector.broadcast %cst_78 : f32 to vector<16x256xf32>
    %193 = arith.addf %192, %191 : vector<16x256xf32>
    %194 = arith.mulf %183, %193 : vector<16x256xf32>
    %195 = arith.truncf %194 : vector<16x256xf32> to vector<16x256xbf16>
    %c0_79 = arith.constant 0 : index
    %c0_80 = arith.constant 0 : index
    %c0_81 = arith.constant 0 : index
    %196 = vector.load %arg13[%c0_79, %c0_80, %c0_81] : memref<1x256x64xbf16, #tpu.memory_space<vmem>>, vector<1x256x64xbf16>
    %197 = vector.shape_cast %196 : vector<1x256x64xbf16> to vector<256x64xbf16>
    %cst_82 = arith.constant dense<0.000000e+00> : vector<16x64xf32>
    %198 = tpu.matmul %195, %197, %cst_82 {dimension_numbers = #tpu.dot_dimension_numbers<[1], [0], [0], [1], [0, 0, 1, 1], [], []>} : vector<16x256xbf16>, vector<256x64xbf16>, vector<16x64xf32> -> vector<16x64xf32>
    %c0_83 = arith.constant 0 : index
    %c0_84 = arith.constant 0 : index
    %c0_85 = arith.constant 0 : index
    %199 = vector.load %arg14[%c0_83, %c0_84, %c0_85] : memref<1x1x64xf32, #tpu.memory_space<vmem>>, vector<1x1x64xf32>
    %200 = vector.shape_cast %199 : vector<1x1x64xf32> to vector<1x64xf32>
    %201 = vector.broadcast %200 : vector<1x64xf32> to vector<16x64xf32>
    %202 = arith.addf %198, %201 : vector<16x64xf32>
    %203 = arith.addf %147, %202 : vector<16x64xf32>
    %c0_86 = arith.constant 0 : index
    %c0_87 = arith.constant 0 : index
    %204 = vector.load %arg18[%c0_86, %c0_87] : memref<16x64xf32, #tpu.memory_space<vmem>>, vector<16x64xf32>
    tpu.vector_store %arg18[%c0_86, %c0_87], %203 {strides = array<i32>} : memref<16x64xf32, #tpu.memory_space<vmem>>, vector<16x64xf32>,
    %c1_i32 = arith.constant 1 : i32
    %205 = arith.cmpi eq, %arg1, %c1_i32 : i32
    %206 = arith.extui %205 : i1 to i32
    %c0_i32_88 = arith.constant 0 : i32
    %207 = arith.cmpi ne, %206, %c0_i32_88 : i32
    scf.if %207 {
      %c0_89 = arith.constant 0 : index
      %c0_90 = arith.constant 0 : index
      %208 = vector.load %arg15[%c0_89, %c0_90] : memref<1x64xf32, #tpu.memory_space<vmem>>, vector<1x64xf32>
      %c0_91 = arith.constant 0 : index
      %c0_92 = arith.constant 0 : index
      %209 = vector.load %arg16[%c0_91, %c0_92] : memref<1x64xf32, #tpu.memory_space<vmem>>, vector<1x64xf32>
      %cst_93 = arith.constant dense<0.000000e+00> : vector<16xf32>
      %210 = vector.multi_reduction <add>, %203, %cst_93 [1] : vector<16x64xf32> to vector<16xf32>
      %211 = vector.shape_cast %210 : vector<16xf32> to vector<16x1xf32>
      %cst_94 = arith.constant 6.400000e+01 : f32
      %212 = vector.broadcast %cst_94 : f32 to vector<16x1xf32>
      %213 = arith.divf %211, %212 : vector<16x1xf32>
      %214 = vector.broadcast %213 : vector<16x1xf32> to vector<16x64xf32>
      %215 = arith.subf %203, %214 : vector<16x64xf32>
      %216 = arith.mulf %215, %215 : vector<16x64xf32>
      %cst_95 = arith.constant dense<0.000000e+00> : vector<16xf32>
      %217 = vector.multi_reduction <add>, %216, %cst_95 [1] : vector<16x64xf32> to vector<16xf32>
      %218 = vector.shape_cast %217 : vector<16xf32> to vector<16x1xf32>
      %cst_96 = arith.constant 6.400000e+01 : f32
      %219 = vector.broadcast %cst_96 : f32 to vector<16x1xf32>
      %220 = arith.divf %218, %219 : vector<16x1xf32>
      %221 = vector.broadcast %213 : vector<16x1xf32> to vector<16x64xf32>
      %222 = arith.subf %203, %221 : vector<16x64xf32>
      %cst_97 = arith.constant 9.99999974E-6 : f32
      %223 = vector.broadcast %cst_97 : f32 to vector<16x1xf32>
      %224 = arith.addf %220, %223 : vector<16x1xf32>
      %225 = math.rsqrt %224 : vector<16x1xf32>
      %226 = vector.broadcast %225 : vector<16x1xf32> to vector<16x64xf32>
      %227 = arith.mulf %222, %226 : vector<16x64xf32>
      %228 = vector.broadcast %208 : vector<1x64xf32> to vector<16x64xf32>
      %229 = arith.mulf %227, %228 : vector<16x64xf32>
      %230 = vector.broadcast %209 : vector<1x64xf32> to vector<16x64xf32>
      %231 = arith.addf %229, %230 : vector<16x64xf32>
      %232 = vector.shape_cast %231 : vector<16x64xf32> to vector<1x16x64xf32>
      %233 = arith.truncf %232 : vector<1x16x64xf32> to vector<1x16x64xbf16>
      %c0_98 = arith.constant 0 : index
      %c0_99 = arith.constant 0 : index
      %c0_100 = arith.constant 0 : index
      %234 = vector.load %arg17[%c0_98, %c0_99, %c0_100] : memref<1x16x64xbf16, #tpu.memory_space<vmem>>, vector<1x16x64xbf16>
      tpu.vector_store %arg17[%c0_98, %c0_99, %c0_100], %233 {strides = array<i32>} : memref<1x16x64xbf16, #tpu.memory_space<vmem>>, vector<1x16x64xbf16>,
    } else {
    }
    return
  }
  func.func @transform_0(%arg0: i32, %arg1: i32) -> (i32, i32, i32) {
    %c0_i32 = arith.constant 0 : i32
    %c0_i32_0 = arith.constant 0 : i32
    %c0_i32_1 = arith.constant 0 : i32
    return %arg0, %c0_i32, %c0_i32_0 : i32, i32, i32
  }
  func.func @transform_1(%arg0: i32, %arg1: i32) -> (i32, i32, i32) {
    %c0_i32 = arith.constant 0 : i32
    %c0_i32_0 = arith.constant 0 : i32
    %c0_i32_1 = arith.constant 0 : i32
    return %arg1, %c0_i32, %c0_i32_0 : i32, i32, i32
  }
  func.func @transform_2(%arg0: i32, %arg1: i32) -> (i32, i32, i32) {
    %c0_i32 = arith.constant 0 : i32
    %c0_i32_0 = arith.constant 0 : i32
    %c0_i32_1 = arith.constant 0 : i32
    return %arg1, %c0_i32, %c0_i32_0 : i32, i32, i32
  }
  func.func @transform_3(%arg0: i32, %arg1: i32) -> (i32, i32, i32) {
    %c0_i32 = arith.constant 0 : i32
    %c0_i32_0 = arith.constant 0 : i32
    %c0_i32_1 = arith.constant 0 : i32
    return %arg1, %c0_i32, %c0_i32_0 : i32, i32, i32
  }
  func.func @transform_4(%arg0: i32, %arg1: i32) -> (i32, i32, i32) {
    %c0_i32 = arith.constant 0 : i32
    %c0_i32_0 = arith.constant 0 : i32
    %c0_i32_1 = arith.constant 0 : i32
    return %arg1, %c0_i32, %c0_i32_0 : i32, i32, i32
  }
  func.func @transform_5(%arg0: i32, %arg1: i32) -> (i32, i32, i32) {
    %c0_i32 = arith.constant 0 : i32
    %c0_i32_0 = arith.constant 0 : i32
    %c0_i32_1 = arith.constant 0 : i32
    return %arg1, %c0_i32, %c0_i32_0 : i32, i32, i32
  }
  func.func @transform_6(%arg0: i32, %arg1: i32) -> (i32, i32, i32) {
    %c0_i32 = arith.constant 0 : i32
    %c0_i32_0 = arith.constant 0 : i32
    %c0_i32_1 = arith.constant 0 : i32
    return %arg1, %c0_i32, %c0_i32_0 : i32, i32, i32
  }
  func.func @transform_7(%arg0: i32, %arg1: i32) -> (i32, i32, i32) {
    %c0_i32 = arith.constant 0 : i32
    %c0_i32_0 = arith.constant 0 : i32
    %c0_i32_1 = arith.constant 0 : i32
    return %arg1, %c0_i32, %c0_i32_0 : i32, i32, i32
  }
  func.func @transform_8(%arg0: i32, %arg1: i32) -> (i32, i32, i32) {
    %c0_i32 = arith.constant 0 : i32
    %c0_i32_0 = arith.constant 0 : i32
    %c0_i32_1 = arith.constant 0 : i32
    return %arg1, %c0_i32, %c0_i32_0 : i32, i32, i32
  }
  func.func @transform_9(%arg0: i32, %arg1: i32) -> (i32, i32, i32) {
    %c0_i32 = arith.constant 0 : i32
    %c0_i32_0 = arith.constant 0 : i32
    %c0_i32_1 = arith.constant 0 : i32
    return %arg1, %c0_i32, %c0_i32_0 : i32, i32, i32
  }
  func.func @transform_10(%arg0: i32, %arg1: i32) -> (i32, i32, i32) {
    %c0_i32 = arith.constant 0 : i32
    %c0_i32_0 = arith.constant 0 : i32
    %c0_i32_1 = arith.constant 0 : i32
    return %arg1, %c0_i32, %c0_i32_0 : i32, i32, i32
  }
  func.func @transform_11(%arg0: i32, %arg1: i32) -> (i32, i32, i32) {
    %c0_i32 = arith.constant 0 : i32
    %c0_i32_0 = arith.constant 0 : i32
    %c0_i32_1 = arith.constant 0 : i32
    return %arg1, %c0_i32, %c0_i32_0 : i32, i32, i32
  }
  func.func @transform_12(%arg0: i32, %arg1: i32) -> (i32, i32, i32) {
    %c0_i32 = arith.constant 0 : i32
    %c0_i32_0 = arith.constant 0 : i32
    %c0_i32_1 = arith.constant 0 : i32
    return %arg1, %c0_i32, %c0_i32_0 : i32, i32, i32
  }
  func.func @transform_13(%arg0: i32, %arg1: i32) -> (i32, i32) {
    %c0_i32 = arith.constant 0 : i32
    %c0_i32_0 = arith.constant 0 : i32
    %c0_i32_1 = arith.constant 0 : i32
    return %c0_i32, %c0_i32_0 : i32, i32
  }
  func.func @transform_14(%arg0: i32, %arg1: i32) -> (i32, i32) {
    %c0_i32 = arith.constant 0 : i32
    %c0_i32_0 = arith.constant 0 : i32
    %c0_i32_1 = arith.constant 0 : i32
    return %c0_i32, %c0_i32_0 : i32, i32
  }
  func.func @transform_15(%arg0: i32, %arg1: i32) -> (i32, i32, i32) {
    %c0_i32 = arith.constant 0 : i32
    %c0_i32_0 = arith.constant 0 : i32
    %c0_i32_1 = arith.constant 0 : i32
    return %arg0, %c0_i32, %c0_i32_0 : i32, i32, i32
  }
}

</mosaic_0001>

<llo_original>
// kernel: nano_gpt2_forward.3
$region0: #{nano_gpt2_forward.3}
  #allocation0 [shape = 'u32[]', space=smem, size = 0x4, offset = 0x4, fixed_abs, tag = 'smem constant byte address 0x4 - core index']
  #allocation1 [shape = 'u32[144,128]{1,0:T(1,128)}', space=vmem, size = 0x12000, scoped, tag = 'internal scratch']
  %s0 = inlined_call_operand.vmem [shape: bf16[32,64], index: 0, kind: input, shape index: {}]
  %s1 = inlined_call_operand.vmem [shape: bf16[512,64], index: 1, kind: input, shape index: {}]
  %s2 = inlined_call_operand.hbm [shape: f32[32,512], index: 2, kind: output, shape index: {}]
  %s3 = sld [smem:[#allocation0]]
  $region18: #{nano_gpt2_forward.3} parent=0
    _
  %s5 = ssub.s32 1, %s3
  %s6 = scalar_select 0, %s5, %s3
  $region1: #{nano_gpt2_forward.3} parent=0
    #allocation2 [shape = 'u8[65536]{0}', space=vmem, size = 0x10000, scoped, tag = 'output window, operand 0, single buffered']
    #allocation3 [shape = 's32[1]{0}', space=sflag, size = 0x4, scoped, tag = 'scoped memory for nano_gpt2_forward.3']
    %7 = vsyncpa [#allocation3], 0
    // Predicated region
    $region2: #{nano_gpt2_forward.3} parent=1 // pred_check
      _
    $region3: #{nano_gpt2_forward.3} parent=1 // pred_check_branch
      %9 = sbr.rel (0) target = $region5
    $region4: #{nano_gpt2_forward.3} parent=1 // pred_region
      _
    $region5: #{nano_gpt2_forward.3} parent=1 // pred_fallthru
      _
    // Predicated region
    $region6: #{nano_gpt2_forward.3} parent=1 // pred_check
      _
    $region7: #{nano_gpt2_forward.3} parent=1 // pred_check_branch
      %11 = sbr.rel (0) target = $region9
    $region8: #{nano_gpt2_forward.3} parent=1 // pred_region
      _
    $region9: #{nano_gpt2_forward.3} parent=1 // pred_fallthru
      _
    %v13 = vld [vmem:[%s0] sm:$0xf]
    %v14 = vld [vmem:[%s0 + $0x4] sm:$0xf]
    %v15 = vld [vmem:[%s0 + $0x8] sm:$0xf]
    %v16 = vld [vmem:[%s0 + $0xc] sm:$0xf]
    %v17 = vld [vmem:[%s1] sm:$0xf]
    %v18 = vld [vmem:[%s1 + $0x4] sm:$0xf]
    %v19 = vld [vmem:[%s1 + $0x8] sm:$0xf]
    %v20 = vld [vmem:[%s1 + $0xc] sm:$0xf]
    %v21 = vld [vmem:[%s1 + $0x10] sm:$0xf]
    %v22 = vld [vmem:[%s1 + $0x14] sm:$0xf]
    %v23 = vld [vmem:[%s1 + $0x18] sm:$0xf]
    %v24 = vld [vmem:[%s1 + $0x1c] sm:$0xf]
    %v25 = vld [vmem:[%s1 + $0x20] sm:$0xf]
    %v26 = vld [vmem:[%s1 + $0x24] sm:$0xf]
    %v27 = vld [vmem:[%s1 + $0x28] sm:$0xf]
    %v28 = vld [vmem:[%s1 + $0x2c] sm:$0xf]
    %v29 = vld [vmem:[%s1 + $0x30] sm:$0xf]
    %v30 = vld [vmem:[%s1 + $0x34] sm:$0xf]
    %v31 = vld [vmem:[%s1 + $0x38] sm:$0xf]
    %v32 = vld [vmem:[%s1 + $0x3c] sm:$0xf]
    %v33 = vld [vmem:[%s1 + $0x40] sm:$0xf]
    %v34 = vld [vmem:[%s1 + $0x44] sm:$0xf]
    %v35 = vld [vmem:[%s1 + $0x48] sm:$0xf]
    %v36 = vld [vmem:[%s1 + $0x4c] sm:$0xf]
    %v37 = vld [vmem:[%s1 + $0x50] sm:$0xf]
    %v38 = vld [vmem:[%s1 + $0x54] sm:$0xf]
    %v39 = vld [vmem:[%s1 + $0x58] sm:$0xf]
    %v40 = vld [vmem:[%s1 + $0x5c] sm:$0xf]
    %v41 = vld [vmem:[%s1 + $0x60] sm:$0xf]
    %v42 = vld [vmem:[%s1 + $0x64] sm:$0xf]
    %v43 = vld [vmem:[%s1 + $0x68] sm:$0xf]
    %v44 = vld [vmem:[%s1 + $0x6c] sm:$0xf]
    %v45 = vld [vmem:[%s1 + $0x70] sm:$0xf]
    %v46 = vld [vmem:[%s1 + $0x74] sm:$0xf]
    %v47 = vld [vmem:[%s1 + $0x78] sm:$0xf]
    %v48 = vld [vmem:[%s1 + $0x7c] sm:$0xf]
    %v49 = vld [vmem:[%s1 + $0x80] sm:$0xf]
    %v50 = vld [vmem:[%s1 + $0x84] sm:$0xf]
    %v51 = vld [vmem:[%s1 + $0x88] sm:$0xf]
    %v52 = vld [vmem:[%s1 + $0x8c] sm:$0xf]
    %v53 = vld [vmem:[%s1 + $0x90] sm:$0xf]
    %v54 = vld [vmem:[%s1 + $0x94] sm:$0xf]
    %v55 = vld [vmem:[%s1 + $0x98] sm:$0xf]
    %v56 = vld [vmem:[%s1 + $0x9c] sm:$0xf]
    %v57 = vld [vmem:[%s1 + $0xa0] sm:$0xf]
    %v58 = vld [vmem:[%s1 + $0xa4] sm:$0xf]
    %v59 = vld [vmem:[%s1 + $0xa8] sm:$0xf]
    %v60 = vld [vmem:[%s1 + $0xac] sm:$0xf]
    %v61 = vld [vmem:[%s1 + $0xb0] sm:$0xf]
    %v62 = vld [vmem:[%s1 + $0xb4] sm:$0xf]
    %v63 = vld [vmem:[%s1 + $0xb8] sm:$0xf]
    %v64 = vld [vmem:[%s1 + $0xbc] sm:$0xf]
    %v65 = vld [vmem:[%s1 + $0xc0] sm:$0xf]
    %v66 = vld [vmem:[%s1 + $0xc4] sm:$0xf]
    %v67 = vld [vmem:[%s1 + $0xc8] sm:$0xf]
    %v68 = vld [vmem:[%s1 + $0xcc] sm:$0xf]
    %v69 = vld [vmem:[%s1 + $0xd0] sm:$0xf]
    %v70 = vld [vmem:[%s1 + $0xd4] sm:$0xf]
    %v71 = vld [vmem:[%s1 + $0xd8] sm:$0xf]
    %v72 = vld [vmem:[%s1 + $0xdc] sm:$0xf]
    %v73 = vld [vmem:[%s1 + $0xe0] sm:$0xf]
    %v74 = vld [vmem:[%s1 + $0xe4] sm:$0xf]
    %v75 = vld [vmem:[%s1 + $0xe8] sm:$0xf]
    %v76 = vld [vmem:[%s1 + $0xec] sm:$0xf]
    %v77 = vld [vmem:[%s1 + $0xf0] sm:$0xf]
    %v78 = vld [vmem:[%s1 + $0xf4] sm:$0xf]
    %v79 = vld [vmem:[%s1 + $0xf8] sm:$0xf]
    %v80 = vld [vmem:[%s1 + $0xfc] sm:$0xf]
    %v85 = vunpack.c.l.b16 %v13
    %v86 = vunpack.c.l.b16 %v14
    %v87 = vunpack.c.l.b16 %v15
    %v88 = vunpack.c.l.b16 %v16
    %v89 = vpack.c.b16 %v86, %v85
    %v90 = vpack.c.b16 %v88, %v87
    %v155 = vunpack.c.l.b16 %v17
    %v156 = vunpack.c.l.b16 %v18
    %v157 = vunpack.c.l.b16 %v19
    %v158 = vunpack.c.l.b16 %v20
    %v159 = vunpack.c.l.b16 %v21
    %v160 = vunpack.c.l.b16 %v22
    %v161 = vunpack.c.l.b16 %v23
    %v162 = vunpack.c.l.b16 %v24
    %v163 = vunpack.c.l.b16 %v25
    %v164 = vunpack.c.l.b16 %v26
    %v165 = vunpack.c.l.b16 %v27
    %v166 = vunpack.c.l.b16 %v28
    %v167 = vunpack.c.l.b16 %v29
    %v168 = vunpack.c.l.b16 %v30
    %v169 = vunpack.c.l.b16 %v31
    %v170 = vunpack.c.l.b16 %v32
    %v171 = vunpack.c.l.b16 %v33
    %v172 = vunpack.c.l.b16 %v34
    %v173 = vunpack.c.l.b16 %v35
    %v174 = vunpack.c.l.b16 %v36
    %v175 = vunpack.c.l.b16 %v37
    %v176 = vunpack.c.l.b16 %v38
    %v177 = vunpack.c.l.b16 %v39
    %v178 = vunpack.c.l.b16 %v40
    %v179 = vunpack.c.l.b16 %v41
    %v180 = vunpack.c.l.b16 %v42
    %v181 = vunpack.c.l.b16 %v43
    %v182 = vunpack.c.l.b16 %v44
    %v183 = vunpack.c.l.b16 %v45
    %v184 = vunpack.c.l.b16 %v46
    %v185 = vunpack.c.l.b16 %v47
    %v186 = vunpack.c.l.b16 %v48
    %v187 = vunpack.c.l.b16 %v49
    %v188 = vunpack.c.l.b16 %v50
    %v189 = vunpack.c.l.b16 %v51
    %v190 = vunpack.c.l.b16 %v52
    %v191 = vunpack.c.l.b16 %v53
    %v192 = vunpack.c.l.b16 %v54
    %v193 = vunpack.c.l.b16 %v55
    %v194 = vunpack.c.l.b16 %v56
    %v195 = vunpack.c.l.b16 %v57
    %v196 = vunpack.c.l.b16 %v58
    %v197 = vunpack.c.l.b16 %v59
    %v198 = vunpack.c.l.b16 %v60
    %v199 = vunpack.c.l.b16 %v61
    %v200 = vunpack.c.l.b16 %v62
    %v201 = vunpack.c.l.b16 %v63
    %v202 = vunpack.c.l.b16 %v64
    %v203 = vunpack.c.l.b16 %v65
    %v204 = vunpack.c.l.b16 %v66
    %v205 = vunpack.c.l.b16 %v67
    %v206 = vunpack.c.l.b16 %v68
    %v207 = vunpack.c.l.b16 %v69
    %v208 = vunpack.c.l.b16 %v70
    %v209 = vunpack.c.l.b16 %v71
    %v210 = vunpack.c.l.b16 %v72
    %v211 = vunpack.c.l.b16 %v73
    %v212 = vunpack.c.l.b16 %v74
    %v213 = vunpack.c.l.b16 %v75
    %v214 = vunpack.c.l.b16 %v76
    %v215 = vunpack.c.l.b16 %v77
    %v216 = vunpack.c.l.b16 %v78
    %v217 = vunpack.c.l.b16 %v79
    %v218 = vunpack.c.l.b16 %v80
    %v219 = vpack.c.b16 %v156, %v155
    %v220 = vpack.c.b16 %v158, %v157
    %v221 = vpack.c.b16 %v160, %v159
    %v222 = vpack.c.b16 %v162, %v161
    %v223 = vpack.c.b16 %v164, %v163
    %v224 = vpack.c.b16 %v166, %v165
    %v225 = vpack.c.b16 %v168, %v167
    %v226 = vpack.c.b16 %v170, %v169
    %v227 = vpack.c.b16 %v172, %v171
    %v228 = vpack.c.b16 %v174, %v173
    %v229 = vpack.c.b16 %v176, %v175
    %v230 = vpack.c.b16 %v178, %v177
    %v231 = vpack.c.b16 %v180, %v179
    %v232 = vpack.c.b16 %v182, %v181
    %v233 = vpack.c.b16 %v184, %v183
    %v234 = vpack.c.b16 %v186, %v185
    %v235 = vpack.c.b16 %v188, %v187
    %v236 = vpack.c.b16 %v190, %v189
    %v237 = vpack.c.b16 %v192, %v191
    %v238 = vpack.c.b16 %v194, %v193
    %v239 = vpack.c.b16 %v196, %v195
    %v240 = vpack.c.b16 %v198, %v197
    %v241 = vpack.c.b16 %v200, %v199
    %v242 = vpack.c.b16 %v202, %v201
    %v243 = vpack.c.b16 %v204, %v203
    %v244 = vpack.c.b16 %v206, %v205
    %v245 = vpack.c.b16 %v208, %v207
    %v246 = vpack.c.b16 %v210, %v209
    %v247 = vpack.c.b16 %v212, %v211
    %v248 = vpack.c.b16 %v214, %v213
    %v249 = vpack.c.b16 %v216, %v215
    %v250 = vpack.c.b16 %v218, %v217
    %vm251 = vcmask 523264
    %v253 = vsel %vm251, %v89, 0
    %v256 = vsel %vm251, %v90, 0
    %v259 = vsel %vm251, %v219, 0
    %v262 = vsel %vm251, %v220, 0
    %v265 = vsel %vm251, %v221, 0
    %v268 = vsel %vm251, %v222, 0
    %v271 = vsel %vm251, %v223, 0
    %v274 = vsel %vm251, %v224, 0
    %v277 = vsel %vm251, %v225, 0
    %v280 = vsel %vm251, %v226, 0
    %v283 = vsel %vm251, %v227, 0
    %v286 = vsel %vm251, %v228, 0
    %v289 = vsel %vm251, %v229, 0
    %v292 = vsel %vm251, %v230, 0
    %v295 = vsel %vm251, %v231, 0
    %v298 = vsel %vm251, %v232, 0
    %v301 = vsel %vm251, %v233, 0
    %v304 = vsel %vm251, %v234, 0
    %v307 = vsel %vm251, %v235, 0
    %v310 = vsel %vm251, %v236, 0
    %v313 = vsel %vm251, %v237, 0
    %v316 = vsel %vm251, %v238, 0
    %v319 = vsel %vm251, %v239, 0
    %v322 = vsel %vm251, %v240, 0
    %v325 = vsel %vm251, %v241, 0
    %v328 = vsel %vm251, %v242, 0
    %v331 = vsel %vm251, %v243, 0
    %v334 = vsel %vm251, %v244, 0
    %v337 = vsel %vm251, %v245, 0
    %v340 = vsel %vm251, %v246, 0
    %v343 = vsel %vm251, %v247, 0
    %v346 = vsel %vm251, %v248, 0
    %v349 = vsel %vm251, %v249, 0
    %v352 = vsel %vm251, %v250, 0
    %354 = vmatprep.subr.bf16.mxu0 0
    %355 = vmatpush1.bf16.xpose.msra.mxu0 %v259
    %356 = vmatprep.subr.bf16.mxu0 0
    %357 = vmatpush1.bf16.xpose.msra.mxu0 %v262
    %358 = vmatprep.subr.bf16.mxu0 0
    %359 = vmatpush1.bf16.xpose.msra.mxu0 %v265
    %360 = vmatprep.subr.bf16.mxu0 0
    %361 = vmatpush1.bf16.xpose.msra.mxu0 %v268
    %362 = vmatprep.subr.bf16.mxu0 0
    %363 = vmatpush1.bf16.xpose.msra.mxu0 %v271
    %364 = vmatprep.subr.bf16.mxu0 0
    %365 = vmatpush1.bf16.xpose.msra.mxu0 %v274
    %366 = vmatprep.subr.bf16.mxu0 0
    %367 = vmatpush1.bf16.xpose.msra.mxu0 %v277
    %368 = vmatprep.subr.bf16.mxu0 0
    %369 = vmatpush1.bf16.xpose.msra.mxu0 %v280
    %370 = vmatprep.subr.bf16.mxu0 0
    %371 = vmatpush1.bf16.xpose.msra.mxu0 %v283
    %372 = vmatprep.subr.bf16.mxu0 0
    %373 = vmatpush1.bf16.xpose.msra.mxu0 %v286
    %374 = vmatprep.subr.bf16.mxu0 0
    %375 = vmatpush1.bf16.xpose.msra.mxu0 %v289
    %376 = vmatprep.subr.bf16.mxu0 0
    %377 = vmatpush1.bf16.xpose.msra.mxu0 %v292
    %378 = vmatprep.subr.bf16.mxu0 0
    %379 = vmatpush1.bf16.xpose.msra.mxu0 %v295
    %380 = vmatprep.subr.bf16.mxu0 0
    %381 = vmatpush1.bf16.xpose.msra.mxu0 %v298
    %382 = vmatprep.subr.bf16.mxu0 0
    %383 = vmatpush1.bf16.xpose.msra.mxu0 %v301
    %384 = vmatprep.subr.bf16.mxu0 0
    %385 = vmatpush1.bf16.xpose.msra.mxu0 %v304
    %386 = vmatprep.mubr.bf16.mxu0 0
    %387 = vmatmul.mubr.bf16.gmra.mrb[0].mxu0 %v253
    %v388 = vpop.f32.mrb[0].mxu0
    %v389 = vadd.f32 0.0, %v388
    %v390 = vpop.f32.mrb[0].mxu0
    %v391 = vadd.f32 0.0, %v390
    %v392 = vpop.f32.mrb[0].mxu0
    %v393 = vadd.f32 0.0, %v392
    %v394 = vpop.f32.mrb[0].mxu0
    %v395 = vadd.f32 0.0, %v394
    %396 = vmatprep.mubr.bf16.mxu0 0
    %397 = vmatmul.mubr.bf16.gmra.mrb[0].mxu0 %v256
    %v398 = vpop.f32.mrb[0].mxu0
    %v399 = vadd.f32 0.0, %v398
    %v400 = vpop.f32.mrb[0].mxu0
    %v401 = vadd.f32 0.0, %v400
    %v402 = vpop.f32.mrb[0].mxu0
    %v403 = vadd.f32 0.0, %v402
    %v404 = vpop.f32.mrb[0].mxu0
    %v405 = vadd.f32 0.0, %v404
    %406 = vdwg.mxu0
    %407 = vmatprep.subr.bf16.mxu0 0
    %408 = vmatpush1.bf16.xpose.msra.mxu0 %v307
    %409 = vmatprep.subr.bf16.mxu0 0
    %410 = vmatpush1.bf16.xpose.msra.mxu0 %v310
    %411 = vmatprep.subr.bf16.mxu0 0
    %412 = vmatpush1.bf16.xpose.msra.mxu0 %v313
    %413 = vmatprep.subr.bf16.mxu0 0
    %414 = vmatpush1.bf16.xpose.msra.mxu0 %v316
    %415 = vmatprep.subr.bf16.mxu0 0
    %416 = vmatpush1.bf16.xpose.msra.mxu0 %v319
    %417 = vmatprep.subr.bf16.mxu0 0
    %418 = vmatpush1.bf16.xpose.msra.mxu0 %v322
    %419 = vmatprep.subr.bf16.mxu0 0
    %420 = vmatpush1.bf16.xpose.msra.mxu0 %v325
    %421 = vmatprep.subr.bf16.mxu0 0
    %422 = vmatpush1.bf16.xpose.msra.mxu0 %v328
    %423 = vmatprep.subr.bf16.mxu0 0
    %424 = vmatpush1.bf16.xpose.msra.mxu0 %v331
    %425 = vmatprep.subr.bf16.mxu0 0
    %426 = vmatpush1.bf16.xpose.msra.mxu0 %v334
    %427 = vmatprep.subr.bf16.mxu0 0
    %428 = vmatpush1.bf16.xpose.msra.mxu0 %v337
    %429 = vmatprep.subr.bf16.mxu0 0
    %430 = vmatpush1.bf16.xpose.msra.mxu0 %v340
    %431 = vmatprep.subr.bf16.mxu0 0
    %432 = vmatpush1.bf16.xpose.msra.mxu0 %v343
    %433 = vmatprep.subr.bf16.mxu0 0
    %434 = vmatpush1.bf16.xpose.msra.mxu0 %v346
    %435 = vmatprep.subr.bf16.mxu0 0
    %436 = vmatpush1.bf16.xpose.msra.mxu0 %v349
    %437 = vmatprep.subr.bf16.mxu0 0
    %438 = vmatpush1.bf16.xpose.msra.mxu0 %v352
    %439 = vmatprep.mubr.bf16.mxu0 0
    %440 = vmatmul.mubr.bf16.gmra.mrb[0].mxu0 %v253
    %v441 = vpop.f32.mrb[0].mxu0
    %v442 = vadd.f32 0.0, %v441
    %v443 = vpop.f32.mrb[0].mxu0
    %v444 = vadd.f32 0.0, %v443
    %v445 = vpop.f32.mrb[0].mxu0
    %v446 = vadd.f32 0.0, %v445
    %v447 = vpop.f32.mrb[0].mxu0
    %v448 = vadd.f32 0.0, %v447
    %449 = vmatprep.mubr.bf16.mxu0 0
    %450 = vmatmul.mubr.bf16.gmra.mrb[0].mxu0 %v256
    %v451 = vpop.f32.mrb[0].mxu0
    %v452 = vadd.f32 0.0, %v451
    %v453 = vpop.f32.mrb[0].mxu0
    %v454 = vadd.f32 0.0, %v453
    %v455 = vpop.f32.mrb[0].mxu0
    %v456 = vadd.f32 0.0, %v455
    %v457 = vpop.f32.mrb[0].mxu0
    %v458 = vadd.f32 0.0, %v457
    %459 = vdwg.mxu0
    %460 = vst [vmem:[#allocation2] sm:$0xff] %v389
    %461 = vst [vmem:[#allocation2 + $0x8] sm:$0xff] %v391
    %462 = vst [vmem:[#allocation2 + $0x10] sm:$0xff] %v442
    %463 = vst [vmem:[#allocation2 + $0x18] sm:$0xff] %v444
    %464 = vst [vmem:[#allocation2 + $0x20] sm:$0xff] %v393
    %465 = vst [vmem:[#allocation2 + $0x28] sm:$0xff] %v395
    %466 = vst [vmem:[#allocation2 + $0x30] sm:$0xff] %v446
    %467 = vst [vmem:[#allocation2 + $0x38] sm:$0xff] %v448
    %468 = vst [vmem:[#allocation2 + $0x40] sm:$0xff] %v399
    %469 = vst [vmem:[#allocation2 + $0x48] sm:$0xff] %v401
    %470 = vst [vmem:[#allocation2 + $0x50] sm:$0xff] %v452
    %471 = vst [vmem:[#allocation2 + $0x58] sm:$0xff] %v454
    %472 = vst [vmem:[#allocation2 + $0x60] sm:$0xff] %v403
    %473 = vst [vmem:[#allocation2 + $0x68] sm:$0xff] %v405
    %474 = vst [vmem:[#allocation2 + $0x70] sm:$0xff] %v456
    %475 = vst [vmem:[#allocation2 + $0x78] sm:$0xff] %v458
    // Predicated region
    $region10: #{nano_gpt2_forward.3} parent=1 // pred_check
      _
    $region11: #{nano_gpt2_forward.3} parent=1 // pred_check_branch
      %477 = sbr.rel (0) target = $region13
    $region12: #{nano_gpt2_forward.3} parent=1 // pred_region
      %s479 = ssub.s32 2048, 2048
      %480 = vsyncadd [#allocation3], %s479
      %s481 = sshll.u32 [#allocation2], 4
      %s482 = int_to_ptr.vmem [resolvable:$true] %s481
      %487 = dma.vmem_to_hbm [thread:$0]  %s482, 2048, %s2, [#allocation3], 512, 512, 32
    $region13: #{nano_gpt2_forward.3} parent=1 // pred_fallthru
      _
    // Predicated region
    $region14: #{nano_gpt2_forward.3} parent=1 // pred_check
      _
    $region15: #{nano_gpt2_forward.3} parent=1 // pred_check_branch
      %489 = sbr.rel (0) target = $region17
    $region16: #{nano_gpt2_forward.3} parent=1 // pred_region
      %490 = dma.done [#allocation3], 2048
    $region17: #{nano_gpt2_forward.3} parent=1 // pred_fallthru
      _
    %491 = vsyncpa [#allocation3], 1

// kernel: nano_gpt2_forward.2
$region0: #{nano_gpt2_forward.2}
  #allocation0 [shape = 'u32[]', space=smem, size = 0x4, offset = 0x4, fixed_abs, tag = 'smem constant byte address 0x4 - core index']
  #allocation1 [shape = 'u32[144,128]{1,0:T(1,128)}', space=vmem, size = 0x12000, scoped, tag = 'internal scratch']
  #allocation2 [shape = 'f32[16,64]{1,0:T(8,128)}', space=vmem, size = 0x2000, scoped, tag = 'scratch operand']
  #allocation3 [shape = 'bf16[16,64]{1,0:T(16,128)(2,1)}', space=vmem, size = 0x1000, scoped, tag = 'scratch operand']
  %s0 = inlined_call_operand.vmem [shape: f32[2,16,64], index: 0, kind: input, shape index: {}]
  %s1 = inlined_call_operand.vmem [shape: f32[2,1,64], index: 1, kind: input, shape index: {}]
  %s2 = inlined_call_operand.vmem [shape: f32[2,1,64], index: 2, kind: input, shape index: {}]
  %s3 = inlined_call_operand.vmem [shape: bf16[2,64,192], index: 3, kind: input, shape index: {}]
  %s4 = inlined_call_operand.vmem [shape: f32[2,1,192], index: 4, kind: input, shape index: {}]
  %s5 = inlined_call_operand.vmem [shape: bf16[2,64,64], index: 5, kind: input, shape index: {}]
  %s6 = inlined_call_operand.vmem [shape: f32[2,1,64], index: 6, kind: input, shape index: {}]
  %s7 = inlined_call_operand.vmem [shape: f32[2,1,64], index: 7, kind: input, shape index: {}]
  %s8 = inlined_call_operand.vmem [shape: f32[2,1,64], index: 8, kind: input, shape index: {}]
  %s9 = inlined_call_operand.vmem [shape: bf16[2,64,256], index: 9, kind: input, shape index: {}]
  %s10 = inlined_call_operand.vmem [shape: f32[2,1,256], index: 10, kind: input, shape index: {}]
  %s11 = inlined_call_operand.vmem [shape: bf16[2,256,64], index: 11, kind: input, shape index: {}]
  %s12 = inlined_call_operand.vmem [shape: f32[2,1,64], index: 12, kind: input, shape index: {}]
  %s13 = inlined_call_operand.vmem [shape: f32[1,64], index: 13, kind: input, shape index: {}]
  %s14 = inlined_call_operand.vmem [shape: f32[1,64], index: 14, kind: input, shape index: {}]
  %s15 = inlined_call_operand.vmem [shape: bf16[2,16,64], index: 15, kind: output, shape index: {}]
  %s16 = sld [smem:[#allocation0]]
  $region101: #{nano_gpt2_forward.2} parent=0
    _
  %s18 = ssub.s32 1, %s16
  %s19 = scalar_select 0, %s18, %s16
  loop: start=0, step=1, limit=6
  $region2: #{nano_gpt2_forward.2} parent=0 // loop_pre_header
    _
  $region3: #{nano_gpt2_forward.2} parent=0 // loop_header
    %s21 = sphi 0, %s25
    %p22 = scmp.ge.s32.totalorder %s21, 6
    %s28 = sphi 0, %s40
    %s29 = sphi 0, %s36
    %s30 = sphi 0, %s28
    %s31 = sphi 0, %s29
    %s32 = sphi 0, %s30
    %s33 = sphi 0, %s31
    %s43 = sphi 0, %s45
    %s46 = sphi 0, %s43
    %s47 = sphi 0, %s46
    %s63 = sphi 0, %s47
    %s69 = sphi 0, %s71
    %s72 = sphi 0, %s69
    %s73 = sphi 0, %s72
    %s89 = sphi 0, %s73
    %s95 = sphi 0, %s97
    %s98 = sphi 0, %s95
    %s99 = sphi 0, %s98
    %s115 = sphi 0, %s99
    %s121 = sphi 0, %s123
    %s124 = sphi 0, %s121
    %s125 = sphi 0, %s124
    %s141 = sphi 0, %s125
    %s147 = sphi 0, %s149
    %s150 = sphi 0, %s147
    %s151 = sphi 0, %s150
    %s167 = sphi 0, %s151
    %s173 = sphi 0, %s175
    %s176 = sphi 0, %s173
    %s177 = sphi 0, %s176
    %s193 = sphi 0, %s177
    %s199 = sphi 0, %s201
    %s202 = sphi 0, %s199
    %s203 = sphi 0, %s202
    %s219 = sphi 0, %s203
    %s225 = sphi 0, %s227
    %s228 = sphi 0, %s225
    %s229 = sphi 0, %s228
    %s245 = sphi 0, %s229
    %s251 = sphi 0, %s253
    %s254 = sphi 0, %s251
    %s255 = sphi 0, %s254
    %s271 = sphi 0, %s255
    %s277 = sphi 0, %s279
    %s280 = sphi 0, %s277
    %s281 = sphi 0, %s280
    %s297 = sphi 0, %s281
    %s303 = sphi 0, %s305
    %s306 = sphi 0, %s303
    %s307 = sphi 0, %s306
    %s323 = sphi 0, %s307
    %s329 = sphi 0, %s331
    %s332 = sphi 0, %s329
    %s333 = sphi 0, %s332
    %s349 = sphi 0, %s333
    %s355 = sphi 0, %s357
    %s358 = sphi 0, %s355
    %s359 = sphi 0, %s358
    %s375 = sphi 0, %s359
    %s379 = sphi 0, %s379
    %s381 = sphi 0, %s379
    %s382 = sphi 0, %s381
    %s396 = sphi 0, %s382
    %s400 = sphi 0, %s400
    %s402 = sphi 0, %s400
    %s403 = sphi 0, %s402
    %s417 = sphi 0, %s403
    %s423 = sphi 0, %s425
    %s426 = sphi 0, %s423
    %s427 = sphi 0, %s426
    %s443 = sphi 0, %s427
  $region4: #{nano_gpt2_forward.2} parent=0 // loop_header_branch
    %24 = sbr.rel (%p22) target = $region8
  $region5: #{nano_gpt2_forward.2} parent=0 // loop_body
    %s26 = ssub.s32 %s21, 1
    %s27 = ssub.s32 %s21, 2
    %s34 = sadd.s32 1, %s29
    %p35 = scmp.ge.s32.totalorder %s34, 2
    %s36 = scalar_select %p35, 0, %s34
    %s37 = sadd.s32 1, %s28
    %s38 = scalar_select %p35, %s37, %s28
    %p39 = scmp.ge.s32.totalorder %s38, 2
    %s40 = scalar_select %p39, 0, %s38
    %s41 = ssub.s32 %s28, %s40
    %p42 = scmp.eq.s32.totalorder %s41, 0
    %s44 = sadd.s32 %s43, 1
    %s45 = scalar_select %p42, %s43, %s44
    %p48 = pneg %p42
    %p49 = scmp.eq.s32.totalorder %s21, 3
    %p50 = por %p48, %p49
    %p51 = scmp.ne.s32.totalorder %s43, %s46
    %p52 = scmp.eq.s32.totalorder %s21, 0
    %p53 = por %p51, %p52
    %p54 = scmp.ne.s32.totalorder %s43, %s46
    %p55 = scmp.eq.s32.totalorder %s26, 3
    %p56 = por %p54, %p55
    %p57 = scmp.ne.s32.totalorder %s46, %s47
    %p58 = scmp.eq.s32.totalorder %s26, 0
    %p59 = por %p57, %p58
    %p60 = scmp.ne.s32.totalorder %s46, %s47
    %p61 = scmp.eq.s32.totalorder %s27, 3
    %p62 = por %p60, %p61
    %p64 = scmp.ne.s32.totalorder %s47, %s63
    %p65 = scmp.eq.s32.totalorder %s27, 0
    %p66 = por %p64, %p65
    %s67 = ssub.s32 %s29, %s36
    %p68 = scmp.eq.s32.totalorder %s67, 0
    %s70 = sadd.s32 %s69, 1
    %s71 = scalar_select %p68, %s69, %s70
    %p74 = pneg %p68
    %p75 = scmp.eq.s32.totalorder %s21, 3
    %p76 = por %p74, %p75
    %p77 = scmp.ne.s32.totalorder %s69, %s72
    %p78 = scmp.eq.s32.totalorder %s21, 0
    %p79 = por %p77, %p78
    %p80 = scmp.ne.s32.totalorder %s69, %s72
    %p81 = scmp.eq.s32.totalorder %s26, 3
    %p82 = por %p80, %p81
    %p83 = scmp.ne.s32.totalorder %s72, %s73
    %p84 = scmp.eq.s32.totalorder %s26, 0
    %p85 = por %p83, %p84
    %p86 = scmp.ne.s32.totalorder %s72, %s73
    %p87 = scmp.eq.s32.totalorder %s27, 3
    %p88 = por %p86, %p87
    %p90 = scmp.ne.s32.totalorder %s73, %s89
    %p91 = scmp.eq.s32.totalorder %s27, 0
    %p92 = por %p90, %p91
    %s93 = ssub.s32 %s29, %s36
    %p94 = scmp.eq.s32.totalorder %s93, 0
    %s96 = sadd.s32 %s95, 1
    %s97 = scalar_select %p94, %s95, %s96
    %p100 = pneg %p94
    %p101 = scmp.eq.s32.totalorder %s21, 3
    %p102 = por %p100, %p101
    %p103 = scmp.ne.s32.totalorder %s95, %s98
    %p104 = scmp.eq.s32.totalorder %s21, 0
    %p105 = por %p103, %p104
    %p106 = scmp.ne.s32.totalorder %s95, %s98
    %p107 = scmp.eq.s32.totalorder %s26, 3
    %p108 = por %p106, %p107
    %p109 = scmp.ne.s32.totalorder %s98, %s99
    %p110 = scmp.eq.s32.totalorder %s26, 0
    %p111 = por %p109, %p110
    %p112 = scmp.ne.s32.totalorder %s98, %s99
    %p113 = scmp.eq.s32.totalorder %s27, 3
    %p114 = por %p112, %p113
    %p116 = scmp.ne.s32.totalorder %s99, %s115
    %p117 = scmp.eq.s32.totalorder %s27, 0
    %p118 = por %p116, %p117
    %s119 = ssub.s32 %s29, %s36
    %p120 = scmp.eq.s32.totalorder %s119, 0
    %s122 = sadd.s32 %s121, 1
    %s123 = scalar_select %p120, %s121, %s122
    %p126 = pneg %p120
    %p127 = scmp.eq.s32.totalorder %s21, 3
    %p128 = por %p126, %p127
    %p129 = scmp.ne.s32.totalorder %s121, %s124
    %p130 = scmp.eq.s32.totalorder %s21, 0
    %p131 = por %p129, %p130
    %p132 = scmp.ne.s32.totalorder %s121, %s124
    %p133 = scmp.eq.s32.totalorder %s26, 3
    %p134 = por %p132, %p133
    %p135 = scmp.ne.s32.totalorder %s124, %s125
    %p136 = scmp.eq.s32.totalorder %s26, 0
    %p137 = por %p135, %p136
    %p138 = scmp.ne.s32.totalorder %s124, %s125
    %p139 = scmp.eq.s32.totalorder %s27, 3
    %p140 = por %p138, %p139
    %p142 = scmp.ne.s32.totalorder %s125, %s141
    %p143 = scmp.eq.s32.totalorder %s27, 0
    %p144 = por %p142, %p143
    %s145 = ssub.s32 %s29, %s36
    %p146 = scmp.eq.s32.totalorder %s145, 0
    %s148 = sadd.s32 %s147, 1
    %s149 = scalar_select %p146, %s147, %s148
    %p152 = pneg %p146
    %p153 = scmp.eq.s32.totalorder %s21, 3
    %p154 = por %p152, %p153
    %p155 = scmp.ne.s32.totalorder %s147, %s150
    %p156 = scmp.eq.s32.totalorder %s21, 0
    %p157 = por %p155, %p156
    %p158 = scmp.ne.s32.totalorder %s147, %s150
    %p159 = scmp.eq.s32.totalorder %s26, 3
    %p160 = por %p158, %p159
    %p161 = scmp.ne.s32.totalorder %s150, %s151
    %p162 = scmp.eq.s32.totalorder %s26, 0
    %p163 = por %p161, %p162
    %p164 = scmp.ne.s32.totalorder %s150, %s151
    %p165 = scmp.eq.s32.totalorder %s27, 3
    %p166 = por %p164, %p165
    %p168 = scmp.ne.s32.totalorder %s151, %s167
    %p169 = scmp.eq.s32.totalorder %s27, 0
    %p170 = por %p168, %p169
    %s171 = ssub.s32 %s29, %s36
    %p172 = scmp.eq.s32.totalorder %s171, 0
    %s174 = sadd.s32 %s173, 1
    %s175 = scalar_select %p172, %s173, %s174
    %p178 = pneg %p172
    %p179 = scmp.eq.s32.totalorder %s21, 3
    %p180 = por %p178, %p179
    %p181 = scmp.ne.s32.totalorder %s173, %s176
    %p182 = scmp.eq.s32.totalorder %s21, 0
    %p183 = por %p181, %p182
    %p184 = scmp.ne.s32.totalorder %s173, %s176
    %p185 = scmp.eq.s32.totalorder %s26, 3
    %p186 = por %p184, %p185
    %p187 = scmp.ne.s32.totalorder %s176, %s177
    %p188 = scmp.eq.s32.totalorder %s26, 0
    %p189 = por %p187, %p188
    %p190 = scmp.ne.s32.totalorder %s176, %s177
    %p191 = scmp.eq.s32.totalorder %s27, 3
    %p192 = por %p190, %p191
    %p194 = scmp.ne.s32.totalorder %s177, %s193
    %p195 = scmp.eq.s32.totalorder %s27, 0
    %p196 = por %p194, %p195
    %s197 = ssub.s32 %s29, %s36
    %p198 = scmp.eq.s32.totalorder %s197, 0
    %s200 = sadd.s32 %s199, 1
    %s201 = scalar_select %p198, %s199, %s200
    %p204 = pneg %p198
    %p205 = scmp.eq.s32.totalorder %s21, 3
    %p206 = por %p204, %p205
    %p207 = scmp.ne.s32.totalorder %s199, %s202
    %p208 = scmp.eq.s32.totalorder %s21, 0
    %p209 = por %p207, %p208
    %p210 = scmp.ne.s32.totalorder %s199, %s202
    %p211 = scmp.eq.s32.totalorder %s26, 3
    %p212 = por %p210, %p211
    %p213 = scmp.ne.s32.totalorder %s202, %s203
    %p214 = scmp.eq.s32.totalorder %s26, 0
    %p215 = por %p213, %p214
    %p216 = scmp.ne.s32.totalorder %s202, %s203
    %p217 = scmp.eq.s32.totalorder %s27, 3
    %p218 = por %p216, %p217
    %p220 = scmp.ne.s32.totalorder %s203, %s219
    %p221 = scmp.eq.s32.totalorder %s27, 0
    %p222 = por %p220, %p221
    %s223 = ssub.s32 %s29, %s36
    %p224 = scmp.eq.s32.totalorder %s223, 0
    %s226 = sadd.s32 %s225, 1
    %s227 = scalar_select %p224, %s225, %s226
    %p230 = pneg %p224
    %p231 = scmp.eq.s32.totalorder %s21, 3
    %p232 = por %p230, %p231
    %p233 = scmp.ne.s32.totalorder %s225, %s228
    %p234 = scmp.eq.s32.totalorder %s21, 0
    %p235 = por %p233, %p234
    %p236 = scmp.ne.s32.totalorder %s225, %s228
    %p237 = scmp.eq.s32.totalorder %s26, 3
    %p238 = por %p236, %p237
    %p239 = scmp.ne.s32.totalorder %s228, %s229
    %p240 = scmp.eq.s32.totalorder %s26, 0
    %p241 = por %p239, %p240
    %p242 = scmp.ne.s32.totalorder %s228, %s229
    %p243 = scmp.eq.s32.totalorder %s27, 3
    %p244 = por %p242, %p243
    %p246 = scmp.ne.s32.totalorder %s229, %s245
    %p247 = scmp.eq.s32.totalorder %s27, 0
    %p248 = por %p246, %p247
    %s249 = ssub.s32 %s29, %s36
    %p250 = scmp.eq.s32.totalorder %s249, 0
    %s252 = sadd.s32 %s251, 1
    %s253 = scalar_select %p250, %s251, %s252
    %p256 = pneg %p250
    %p257 = scmp.eq.s32.totalorder %s21, 3
    %p258 = por %p256, %p257
    %p259 = scmp.ne.s32.totalorder %s251, %s254
    %p260 = scmp.eq.s32.totalorder %s21, 0
    %p261 = por %p259, %p260
    %p262 = scmp.ne.s32.totalorder %s251, %s254
    %p263 = scmp.eq.s32.totalorder %s26, 3
    %p264 = por %p262, %p263
    %p265 = scmp.ne.s32.totalorder %s254, %s255
    %p266 = scmp.eq.s32.totalorder %s26, 0
    %p267 = por %p265, %p266
    %p268 = scmp.ne.s32.totalorder %s254, %s255
    %p269 = scmp.eq.s32.totalorder %s27, 3
    %p270 = por %p268, %p269
    %p272 = scmp.ne.s32.totalorder %s255, %s271
    %p273 = scmp.eq.s32.totalorder %s27, 0
    %p274 = por %p272, %p273
    %s275 = ssub.s32 %s29, %s36
    %p276 = scmp.eq.s32.totalorder %s275, 0
    %s278 = sadd.s32 %s277, 1
    %s279 = scalar_select %p276, %s277, %s278
    %p282 = pneg %p276
    %p283 = scmp.eq.s32.totalorder %s21, 3
    %p284 = por %p282, %p283
    %p285 = scmp.ne.s32.totalorder %s277, %s280
    %p286 = scmp.eq.s32.totalorder %s21, 0
    %p287 = por %p285, %p286
    %p288 = scmp.ne.s32.totalorder %s277, %s280
    %p289 = scmp.eq.s32.totalorder %s26, 3
    %p290 = por %p288, %p289
    %p291 = scmp.ne.s32.totalorder %s280, %s281
    %p292 = scmp.eq.s32.totalorder %s26, 0
    %p293 = por %p291, %p292
    %p294 = scmp.ne.s32.totalorder %s280, %s281
    %p295 = scmp.eq.s32.totalorder %s27, 3
    %p296 = por %p294, %p295
    %p298 = scmp.ne.s32.totalorder %s281, %s297
    %p299 = scmp.eq.s32.totalorder %s27, 0
    %p300 = por %p298, %p299
    %s301 = ssub.s32 %s29, %s36
    %p302 = scmp.eq.s32.totalorder %s301, 0
    %s304 = sadd.s32 %s303, 1
    %s305 = scalar_select %p302, %s303, %s304
    %p308 = pneg %p302
    %p309 = scmp.eq.s32.totalorder %s21, 3
    %p310 = por %p308, %p309
    %p311 = scmp.ne.s32.totalorder %s303, %s306
    %p312 = scmp.eq.s32.totalorder %s21, 0
    %p313 = por %p311, %p312
    %p314 = scmp.ne.s32.totalorder %s303, %s306
    %p315 = scmp.eq.s32.totalorder %s26, 3
    %p316 = por %p314, %p315
    %p317 = scmp.ne.s32.totalorder %s306, %s307
    %p318 = scmp.eq.s32.totalorder %s26, 0
    %p319 = por %p317, %p318
    %p320 = scmp.ne.s32.totalorder %s306, %s307
    %p321 = scmp.eq.s32.totalorder %s27, 3
    %p322 = por %p320, %p321
    %p324 = scmp.ne.s32.totalorder %s307, %s323
    %p325 = scmp.eq.s32.totalorder %s27, 0
    %p326 = por %p324, %p325
    %s327 = ssub.s32 %s29, %s36
    %p328 = scmp.eq.s32.totalorder %s327, 0
    %s330 = sadd.s32 %s329, 1
    %s331 = scalar_select %p328, %s329, %s330
    %p334 = pneg %p328
    %p335 = scmp.eq.s32.totalorder %s21, 3
    %p336 = por %p334, %p335
    %p337 = scmp.ne.s32.totalorder %s329, %s332
    %p338 = scmp.eq.s32.totalorder %s21, 0
    %p339 = por %p337, %p338
    %p340 = scmp.ne.s32.totalorder %s329, %s332
    %p341 = scmp.eq.s32.totalorder %s26, 3
    %p342 = por %p340, %p341
    %p343 = scmp.ne.s32.totalorder %s332, %s333
    %p344 = scmp.eq.s32.totalorder %s26, 0
    %p345 = por %p343, %p344
    %p346 = scmp.ne.s32.totalorder %s332, %s333
    %p347 = scmp.eq.s32.totalorder %s27, 3
    %p348 = por %p346, %p347
    %p350 = scmp.ne.s32.totalorder %s333, %s349
    %p351 = scmp.eq.s32.totalorder %s27, 0
    %p352 = por %p350, %p351
    %s353 = ssub.s32 %s29, %s36
    %p354 = scmp.eq.s32.totalorder %s353, 0
    %s356 = sadd.s32 %s355, 1
    %s357 = scalar_select %p354, %s355, %s356
    %p360 = pneg %p354
    %p361 = scmp.eq.s32.totalorder %s21, 3
    %p362 = por %p360, %p361
    %p363 = scmp.ne.s32.totalorder %s355, %s358
    %p364 = scmp.eq.s32.totalorder %s21, 0
    %p365 = por %p363, %p364
    %p366 = scmp.ne.s32.totalorder %s355, %s358
    %p367 = scmp.eq.s32.totalorder %s26, 3
    %p368 = por %p366, %p367
    %p369 = scmp.ne.s32.totalorder %s358, %s359
    %p370 = scmp.eq.s32.totalorder %s26, 0
    %p371 = por %p369, %p370
    %p372 = scmp.ne.s32.totalorder %s358, %s359
    %p373 = scmp.eq.s32.totalorder %s27, 3
    %p374 = por %p372, %p373
    %p376 = scmp.ne.s32.totalorder %s359, %s375
    %p377 = scmp.eq.s32.totalorder %s27, 0
    %p378 = por %p376, %p377
    %s380 = sadd.s32 %s379, 1
    %p383 = scmp.eq.s32.totalorder %s21, 3
    %p384 = scmp.ne.s32.totalorder %s379, %s381
    %p385 = scmp.eq.s32.totalorder %s21, 0
    %p386 = por %p384, %p385
    %p387 = scmp.ne.s32.totalorder %s379, %s381
    %p388 = scmp.eq.s32.totalorder %s26, 3
    %p389 = por %p387, %p388
    %p390 = scmp.ne.s32.totalorder %s381, %s382
    %p391 = scmp.eq.s32.totalorder %s26, 0
    %p392 = por %p390, %p391
    %p393 = scmp.ne.s32.totalorder %s381, %s382
    %p394 = scmp.eq.s32.totalorder %s27, 3
    %p395 = por %p393, %p394
    %p397 = scmp.ne.s32.totalorder %s382, %s396
    %p398 = scmp.eq.s32.totalorder %s27, 0
    %p399 = por %p397, %p398
    %s401 = sadd.s32 %s400, 1
    %p404 = scmp.eq.s32.totalorder %s21, 3
    %p405 = scmp.ne.s32.totalorder %s400, %s402
    %p406 = scmp.eq.s32.totalorder %s21, 0
    %p407 = por %p405, %p406
    %p408 = scmp.ne.s32.totalorder %s400, %s402
    %p409 = scmp.eq.s32.totalorder %s26, 3
    %p410 = por %p408, %p409
    %p411 = scmp.ne.s32.totalorder %s402, %s403
    %p412 = scmp.eq.s32.totalorder %s26, 0
    %p413 = por %p411, %p412
    %p414 = scmp.ne.s32.totalorder %s402, %s403
    %p415 = scmp.eq.s32.totalorder %s27, 3
    %p416 = por %p414, %p415
    %p418 = scmp.ne.s32.totalorder %s403, %s417
    %p419 = scmp.eq.s32.totalorder %s27, 0
    %p420 = por %p418, %p419
    %s421 = ssub.s32 %s28, %s40
    %p422 = scmp.eq.s32.totalorder %s421, 0
    %s424 = sadd.s32 %s423, 1
    %s425 = scalar_select %p422, %s423, %s424
    %p428 = pneg %p422
    %p429 = scmp.eq.s32.totalorder %s21, 3
    %p430 = por %p428, %p429
    %p431 = scmp.ne.s32.totalorder %s423, %s426
    %p432 = scmp.eq.s32.totalorder %s21, 0
    %p433 = por %p431, %p432
    %p434 = scmp.ne.s32.totalorder %s423, %s426
    %p435 = scmp.eq.s32.totalorder %s26, 3
    %p436 = por %p434, %p435
    %p437 = scmp.ne.s32.totalorder %s426, %s427
    %p438 = scmp.eq.s32.totalorder %s26, 0
    %p439 = por %p437, %p438
    %p440 = scmp.ne.s32.totalorder %s426, %s427
    %p441 = scmp.eq.s32.totalorder %s27, 3
    %p442 = por %p440, %p441
    %p444 = scmp.ne.s32.totalorder %s427, %s443
    %p445 = scmp.eq.s32.totalorder %s27, 0
    %p446 = por %p444, %p445
    %p447 = scmp.le.s32.totalorder 1, %s21
    %p448 = scmp.lt.s32.totalorder %s21, 5
    %p449 = pnand %p447, %p448
    %p450 = pneg %p449
    // Predicated region
    $region9: #{nano_gpt2_forward.2} parent=5 // pred_check
      _
    $region10: #{nano_gpt2_forward.2} parent=5 // pred_check_branch
      %452 = sbr.rel (%p449) target = $region12
    $region11: #{nano_gpt2_forward.2} parent=5 // pred_region
      %s453 = ssub.s32 %s21, 1
      // Predicated region
      $region13: #{nano_gpt2_forward.2} parent=11 // pred_check
        %p454 = pneg %p392
      $region14: #{nano_gpt2_forward.2} parent=11 // pred_check_branch
        %456 = sbr.rel (%p454) target = $region16
      $region15: #{nano_gpt2_forward.2} parent=11 // pred_region
        _
      $region16: #{nano_gpt2_forward.2} parent=11 // pred_fallthru
        _
      // Predicated region
      $region17: #{nano_gpt2_forward.2} parent=11 // pred_check
        %p457 = pneg %p413
      $region18: #{nano_gpt2_forward.2} parent=11 // pred_check_branch
        %459 = sbr.rel (%p457) target = $region20
      $region19: #{nano_gpt2_forward.2} parent=11 // pred_region
        _
      $region20: #{nano_gpt2_forward.2} parent=11 // pred_fallthru
        _
    $region12: #{nano_gpt2_forward.2} parent=5 // pred_fallthru
      _
    %p460 = scmp.lt.s32.totalorder %s21, 4
    // Predicated region
    $region21: #{nano_gpt2_forward.2} parent=5 // pred_check
      %p461 = pneg %p460
    $region22: #{nano_gpt2_forward.2} parent=5 // pred_check_branch
      %463 = sbr.rel (%p461) target = $region24
    $region23: #{nano_gpt2_forward.2} parent=5 // pred_region
      // Predicated region
      $region25: #{nano_gpt2_forward.2} parent=23 // pred_check
        %p464 = pneg %p53
      $region26: #{nano_gpt2_forward.2} parent=23 // pred_check_branch
        %466 = sbr.rel (%p464) target = $region28
      $region27: #{nano_gpt2_forward.2} parent=23 // pred_region
        %p467 = scmp.lt.s32.totalorder %s28, 1
        %s468 = scalar_select %p467, %s28, 1
        %s469 = smul.addr %s468, 2
        %s470 = smul.addr %s469, 8
        %s471 = scalar_lea.vmem %s0, %s470
      $region28: #{nano_gpt2_forward.2} parent=23 // pred_fallthru
        _
      // Predicated region
      $region29: #{nano_gpt2_forward.2} parent=23 // pred_check
        %p472 = pneg %p79
      $region30: #{nano_gpt2_forward.2} parent=23 // pred_check_branch
        %474 = sbr.rel (%p472) target = $region32
      $region31: #{nano_gpt2_forward.2} parent=23 // pred_region
        %p475 = scmp.lt.s32.totalorder %s29, 1
        %s476 = scalar_select %p475, %s29, 1
        %s477 = scalar_lea.vmem %s1, %s476
      $region32: #{nano_gpt2_forward.2} parent=23 // pred_fallthru
        _
      // Predicated region
      $region33: #{nano_gpt2_forward.2} parent=23 // pred_check
        %p478 = pneg %p105
      $region34: #{nano_gpt2_forward.2} parent=23 // pred_check_branch
        %480 = sbr.rel (%p478) target = $region36
      $region35: #{nano_gpt2_forward.2} parent=23 // pred_region
        %p481 = scmp.lt.s32.totalorder %s29, 1
        %s482 = scalar_select %p481, %s29, 1
        %s483 = scalar_lea.vmem %s2, %s482
      $region36: #{nano_gpt2_forward.2} parent=23 // pred_fallthru
        _
      // Predicated region
      $region37: #{nano_gpt2_forward.2} parent=23 // pred_check
        %p484 = pneg %p131
      $region38: #{nano_gpt2_forward.2} parent=23 // pred_check_branch
        %486 = sbr.rel (%p484) target = $region40
      $region39: #{nano_gpt2_forward.2} parent=23 // pred_region
        %p487 = scmp.lt.s32.totalorder %s29, 1
        %s488 = scalar_select %p487, %s29, 1
        %s489 = smul.addr %s488, 16
        %s490 = smul.addr %s489, 4
        %s491 = scalar_lea.vmem %s3, %s490
      $region40: #{nano_gpt2_forward.2} parent=23 // pred_fallthru
        _
      // Predicated region
      $region41: #{nano_gpt2_forward.2} parent=23 // pred_check
        %p492 = pneg %p157
      $region42: #{nano_gpt2_forward.2} parent=23 // pred_check_branch
        %494 = sbr.rel (%p492) target = $region44
      $region43: #{nano_gpt2_forward.2} parent=23 // pred_region
        %p495 = scmp.lt.s32.totalorder %s29, 1
        %s496 = scalar_select %p495, %s29, 1
        %s497 = smul.addr %s496, 2
        %s498 = scalar_lea.vmem %s4, %s497
      $region44: #{nano_gpt2_forward.2} parent=23 // pred_fallthru
        _
      // Predicated region
      $region45: #{nano_gpt2_forward.2} parent=23 // pred_check
        %p499 = pneg %p183
      $region46: #{nano_gpt2_forward.2} parent=23 // pred_check_branch
        %501 = sbr.rel (%p499) target = $region48
      $region47: #{nano_gpt2_forward.2} parent=23 // pred_region
        %p502 = scmp.lt.s32.totalorder %s29, 1
        %s503 = scalar_select %p502, %s29, 1
        %s504 = smul.addr %s503, 8
        %s505 = smul.addr %s504, 4
        %s506 = scalar_lea.vmem %s5, %s505
      $region48: #{nano_gpt2_forward.2} parent=23 // pred_fallthru
        _
      // Predicated region
      $region49: #{nano_gpt2_forward.2} parent=23 // pred_check
        %p507 = pneg %p209
      $region50: #{nano_gpt2_forward.2} parent=23 // pred_check_branch
        %509 = sbr.rel (%p507) target = $region52
      $region51: #{nano_gpt2_forward.2} parent=23 // pred_region
        %p510 = scmp.lt.s32.totalorder %s29, 1
        %s511 = scalar_select %p510, %s29, 1
        %s512 = scalar_lea.vmem %s6, %s511
      $region52: #{nano_gpt2_forward.2} parent=23 // pred_fallthru
        _
      // Predicated region
      $region53: #{nano_gpt2_forward.2} parent=23 // pred_check
        %p513 = pneg %p235
      $region54: #{nano_gpt2_forward.2} parent=23 // pred_check_branch
        %515 = sbr.rel (%p513) target = $region56
      $region55: #{nano_gpt2_forward.2} parent=23 // pred_region
        %p516 = scmp.lt.s32.totalorder %s29, 1
        %s517 = scalar_select %p516, %s29, 1
        %s518 = scalar_lea.vmem %s7, %s517
      $region56: #{nano_gpt2_forward.2} parent=23 // pred_fallthru
        _
      // Predicated region
      $region57: #{nano_gpt2_forward.2} parent=23 // pred_check
        %p519 = pneg %p261
      $region58: #{nano_gpt2_forward.2} parent=23 // pred_check_branch
        %521 = sbr.rel (%p519) target = $region60
      $region59: #{nano_gpt2_forward.2} parent=23 // pred_region
        %p522 = scmp.lt.s32.totalorder %s29, 1
        %s523 = scalar_select %p522, %s29, 1
        %s524 = scalar_lea.vmem %s8, %s523
      $region60: #{nano_gpt2_forward.2} parent=23 // pred_fallthru
        _
      // Predicated region
      $region61: #{nano_gpt2_forward.2} parent=23 // pred_check
        %p525 = pneg %p287
      $region62: #{nano_gpt2_forward.2} parent=23 // pred_check_branch
        %527 = sbr.rel (%p525) target = $region64
      $region63: #{nano_gpt2_forward.2} parent=23 // pred_region
        %p528 = scmp.lt.s32.totalorder %s29, 1
        %s529 = scalar_select %p528, %s29, 1
        %s530 = smul.addr %s529, 16
        %s531 = smul.addr %s530, 4
        %s532 = scalar_lea.vmem %s9, %s531
      $region64: #{nano_gpt2_forward.2} parent=23 // pred_fallthru
        _
      // Predicated region
      $region65: #{nano_gpt2_forward.2} parent=23 // pred_check
        %p533 = pneg %p313
      $region66: #{nano_gpt2_forward.2} parent=23 // pred_check_branch
        %535 = sbr.rel (%p533) target = $region68
      $region67: #{nano_gpt2_forward.2} parent=23 // pred_region
        %p536 = scmp.lt.s32.totalorder %s29, 1
        %s537 = scalar_select %p536, %s29, 1
        %s538 = smul.addr %s537, 2
        %s539 = scalar_lea.vmem %s10, %s538
      $region68: #{nano_gpt2_forward.2} parent=23 // pred_fallthru
        _
      // Predicated region
      $region69: #{nano_gpt2_forward.2} parent=23 // pred_check
        %p540 = pneg %p339
      $region70: #{nano_gpt2_forward.2} parent=23 // pred_check_branch
        %542 = sbr.rel (%p540) target = $region72
      $region71: #{nano_gpt2_forward.2} parent=23 // pred_region
        %p543 = scmp.lt.s32.totalorder %s29, 1
        %s544 = scalar_select %p543, %s29, 1
        %s545 = smul.addr %s544, 32
        %s546 = smul.addr %s545, 4
        %s547 = scalar_lea.vmem %s11, %s546
      $region72: #{nano_gpt2_forward.2} parent=23 // pred_fallthru
        _
      // Predicated region
      $region73: #{nano_gpt2_forward.2} parent=23 // pred_check
        %p548 = pneg %p365
      $region74: #{nano_gpt2_forward.2} parent=23 // pred_check_branch
        %550 = sbr.rel (%p548) target = $region76
      $region75: #{nano_gpt2_forward.2} parent=23 // pred_region
        %p551 = scmp.lt.s32.totalorder %s29, 1
        %s552 = scalar_select %p551, %s29, 1
        %s553 = scalar_lea.vmem %s12, %s552
      $region76: #{nano_gpt2_forward.2} parent=23 // pred_fallthru
        _
    $region24: #{nano_gpt2_forward.2} parent=5 // pred_fallthru
      _
    %p554 = scmp.le.s32.totalorder 1, %s21
    %p555 = scmp.lt.s32.totalorder %s21, 5
    %p556 = pnand %p554, %p555
    %p557 = pneg %p556
    // Predicated region
    $region77: #{nano_gpt2_forward.2} parent=5 // pred_check
      _
    $region78: #{nano_gpt2_forward.2} parent=5 // pred_check_branch
      %559 = sbr.rel (%p556) target = $region80
    $region79: #{nano_gpt2_forward.2} parent=5 // pred_region
      %s560 = ssub.s32 %s21, 1
      %p561 = scmp.lt.s32.totalorder %s30, 1
      %s562 = scalar_select %p561, %s30, 1
      %s563 = smul.addr %s562, 2
      %s564 = smul.addr %s563, 8
      %s565 = scalar_lea.vmem %s0, %s564
      %p566 = pneg %p59
      %p567 = pneg %p56
      %p568 = scmp.lt.s32.totalorder %s31, 1
      %s569 = scalar_select %p568, %s31, 1
      %s570 = scalar_lea.vmem %s1, %s569
      %p571 = pneg %p85
      %p572 = pneg %p82
      %p573 = scmp.lt.s32.totalorder %s31, 1
      %s574 = scalar_select %p573, %s31, 1
      %s575 = scalar_lea.vmem %s2, %s574
      %p576 = pneg %p111
      %p577 = pneg %p108
      %p578 = scmp.lt.s32.totalorder %s31, 1
      %s579 = scalar_select %p578, %s31, 1
      %s580 = smul.addr %s579, 16
      %s581 = smul.addr %s580, 4
      %s582 = scalar_lea.vmem %s3, %s581
      %p583 = pneg %p137
      %p584 = pneg %p134
      %p585 = scmp.lt.s32.totalorder %s31, 1
      %s586 = scalar_select %p585, %s31, 1
      %s587 = smul.addr %s586, 2
      %s588 = scalar_lea.vmem %s4, %s587
      %p589 = pneg %p163
      %p590 = pneg %p160
      %p591 = scmp.lt.s32.totalorder %s31, 1
      %s592 = scalar_select %p591, %s31, 1
      %s593 = smul.addr %s592, 8
      %s594 = smul.addr %s593, 4
      %s595 = scalar_lea.vmem %s5, %s594
      %p596 = pneg %p189
      %p597 = pneg %p186
      %p598 = scmp.lt.s32.totalorder %s31, 1
      %s599 = scalar_select %p598, %s31, 1
      %s600 = scalar_lea.vmem %s6, %s599
      %p601 = pneg %p215
      %p602 = pneg %p212
      %p603 = scmp.lt.s32.totalorder %s31, 1
      %s604 = scalar_select %p603, %s31, 1
      %s605 = scalar_lea.vmem %s7, %s604
      %p606 = pneg %p241
      %p607 = pneg %p238
      %p608 = scmp.lt.s32.totalorder %s31, 1
      %s609 = scalar_select %p608, %s31, 1
      %s610 = scalar_lea.vmem %s8, %s609
      %p611 = pneg %p267
      %p612 = pneg %p264
      %p613 = scmp.lt.s32.totalorder %s31, 1
      %s614 = scalar_select %p613, %s31, 1
      %s615 = smul.addr %s614, 16
      %s616 = smul.addr %s615, 4
      %s617 = scalar_lea.vmem %s9, %s616
      %p618 = pneg %p293
      %p619 = pneg %p290
      %p620 = scmp.lt.s32.totalorder %s31, 1
      %s621 = scalar_select %p620, %s31, 1
      %s622 = smul.addr %s621, 2
      %s623 = scalar_lea.vmem %s10, %s622
      %p624 = pneg %p319
      %p625 = pneg %p316
      %p626 = scmp.lt.s32.totalorder %s31, 1
      %s627 = scalar_select %p626, %s31, 1
      %s628 = smul.addr %s627, 32
      %s629 = smul.addr %s628, 4
      %s630 = scalar_lea.vmem %s11, %s629
      %p631 = pneg %p345
      %p632 = pneg %p342
      %p633 = scmp.lt.s32.totalorder %s31, 1
      %s634 = scalar_select %p633, %s31, 1
      %s635 = scalar_lea.vmem %s12, %s634
      %p636 = pneg %p371
      %p637 = pneg %p368
      %p638 = pneg %p392
      %p639 = pneg %p389
      %p640 = pneg %p413
      %p641 = pneg %p410
      %p642 = pneg %p439
      %p643 = pneg %p436
      %p644 = scmp.lt.s32.totalorder %s30, 1
      %s645 = scalar_select %p644, %s30, 1
      %s646 = smul.addr %s645, 2
      %s647 = smul.addr %s646, 4
      %s648 = scalar_lea.vmem %s15, %s647
      %p649 = scmp.lt.s32.totalorder %s30, 1
      %s650 = scalar_select %p649, %s30, 1
      %s651 = smul.addr %s650, 2
      %s652 = smul.addr %s651, 8
      %s653 = scalar_lea.vmem %s0, %s652
      %p654 = scmp.lt.s32.totalorder %s31, 1
      %s655 = scalar_select %p654, %s31, 1
      %s656 = scalar_lea.vmem %s1, %s655
      %p657 = scmp.lt.s32.totalorder %s31, 1
      %s658 = scalar_select %p657, %s31, 1
      %s659 = scalar_lea.vmem %s2, %s658
      %p660 = scmp.lt.s32.totalorder %s31, 1
      %s661 = scalar_select %p660, %s31, 1
      %s662 = smul.addr %s661, 16
      %s663 = smul.addr %s662, 4
      %s664 = scalar_lea.vmem %s3, %s663
      %p665 = scmp.lt.s32.totalorder %s31, 1
      %s666 = scalar_select %p665, %s31, 1
      %s667 = smul.addr %s666, 2
      %s668 = scalar_lea.vmem %s4, %s667
      %p669 = scmp.lt.s32.totalorder %s31, 1
      %s670 = scalar_select %p669, %s31, 1
      %s671 = smul.addr %s670, 8
      %s672 = smul.addr %s671, 4
      %s673 = scalar_lea.vmem %s5, %s672
      %p674 = scmp.lt.s32.totalorder %s31, 1
      %s675 = scalar_select %p674, %s31, 1
      %s676 = scalar_lea.vmem %s6, %s675
      %p677 = scmp.lt.s32.totalorder %s31, 1
      %s678 = scalar_select %p677, %s31, 1
      %s679 = scalar_lea.vmem %s7, %s678
      %p680 = scmp.lt.s32.totalorder %s31, 1
      %s681 = scalar_select %p680, %s31, 1
      %s682 = scalar_lea.vmem %s8, %s681
      %p683 = scmp.lt.s32.totalorder %s31, 1
      %s684 = scalar_select %p683, %s31, 1
      %s685 = smul.addr %s684, 16
      %s686 = smul.addr %s685, 4
      %s687 = scalar_lea.vmem %s9, %s686
      %p688 = scmp.lt.s32.totalorder %s31, 1
      %s689 = scalar_select %p688, %s31, 1
      %s690 = smul.addr %s689, 2
      %s691 = scalar_lea.vmem %s10, %s690
      %p692 = scmp.lt.s32.totalorder %s31, 1
      %s693 = scalar_select %p692, %s31, 1
      %s694 = smul.addr %s693, 32
      %s695 = smul.addr %s694, 4
      %s696 = scalar_lea.vmem %s11, %s695
      %p697 = scmp.lt.s32.totalorder %s31, 1
      %s698 = scalar_select %p697, %s31, 1
      %s699 = scalar_lea.vmem %s12, %s698
      %p700 = scmp.lt.s32.totalorder %s30, 1
      %s701 = scalar_select %p700, %s30, 1
      %s702 = smul.addr %s701, 2
      %s703 = smul.addr %s702, 4
      %s704 = scalar_lea.vmem %s15, %s703
      %p706 = scmp.eq.s32.totalorder %s31, 0
      // Predicated region
      $region81: #{nano_gpt2_forward.2} parent=79 // pred_check
        %p707 = pneg %p706
      $region82: #{nano_gpt2_forward.2} parent=79 // pred_check_branch
        %709 = sbr.rel (%p707) target = $region84
      $region83: #{nano_gpt2_forward.2} parent=79 // pred_region
        %v710 = vld [vmem:[%s653] sm:$0xff]
        %v711 = vld [vmem:[%s653 + $0x8] sm:$0xff]
        %vm712 = vcmask 523264
        %713 = vst.msk [vmem:[#allocation2] sm:$0xff] %vm712, %v710
        %714 = vst.msk [vmem:[#allocation2 + $0x8] sm:$0xff] %vm712, %v711
      $region84: #{nano_gpt2_forward.2} parent=79 // pred_fallthru
        _
      %v715 = vld [vmem:[#allocation2] sm:$0xff]
      %v716 = vld [vmem:[#allocation2 + $0x8] sm:$0xff]
      %v717 = vld [vmem:[%s656] sm:$0x1]
      %v718 = vld [vmem:[%s659] sm:$0x1]
      %vm719 = vcmask 523264
      %v720 = vsel %vm719, %v715, 0.0
      %721 = vadd.xlane.f32.xlu0 %v720
      %v722 = vpop.xlane.xlu0 %721
      %v723 = vsel %vm719, %v716, 0.0
      %724 = vadd.xlane.f32.xlu0 %v723
      %v725 = vpop.xlane.xlu0 %724
      %v726 = vrcp.pop 64.0
      %v727 = vmul.f32 %v722, %v726
      %v728 = vmul.f32 %v725, %v726
      %v729 = vsub.f32 %v715, %v727
      %v730 = vsub.f32 %v716, %v728
      %v731 = vmul.f32 %v729, %v729
      %v732 = vmul.f32 %v730, %v730
      %v733 = vsel %vm719, %v731, 0.0
      %734 = vadd.xlane.f32.xlu0 %v733
      %v735 = vpop.xlane.xlu0 %734
      %v736 = vsel %vm719, %v732, 0.0
      %737 = vadd.xlane.f32.xlu0 %v736
      %v738 = vpop.xlane.xlu0 %737
      %v739 = vmul.f32 %v735, %v726
      %v740 = vmul.f32 %v738, %v726
      %v741 = vadd.f32 %v739, 1e-05
      %v742 = vadd.f32 %v740, 1e-05
      %v743 = vrsqrt.pop %v741
      %v744 = vrsqrt.pop %v742
      %v745 = vmul.f32 %v729, %v743
      %v746 = vmul.f32 %v730, %v744
      %v748 = vlaneseq
      %v749 = vshrl.u32 %v748, 7
      %v750 = vsub.s32 0, %v749
      %v751 = vrot.slane %v717, %v750
      %v753 = vmul.f32 %v745, %v751
      %v754 = vmul.f32 %v746, %v751
      %v756 = vlaneseq
      %v757 = vshrl.u32 %v756, 7
      %v758 = vsub.s32 0, %v757
      %v759 = vrot.slane %v718, %v758
      %v761 = vadd.f32 %v753, %v759
      %v762 = vadd.f32 %v754, %v759
      %v763 = vpack.c.bf16 %v762, %v761
      %v764 = vld [vmem:[%s664] sm:$0xff]
      %v765 = vld [vmem:[%s664 + $0x8] sm:$0xff]
      %v766 = vld [vmem:[%s664 + $0x10] sm:$0xff]
      %v767 = vld [vmem:[%s664 + $0x18] sm:$0xff]
      %v768 = vld [vmem:[%s664 + $0x20] sm:$0xff]
      %v769 = vld [vmem:[%s664 + $0x28] sm:$0xff]
      %v770 = vld [vmem:[%s664 + $0x30] sm:$0xff]
      %v771 = vld [vmem:[%s664 + $0x38] sm:$0xff]
      %v772 = vld [vmem:[%s668] sm:$0x3]
      %v774 = vlaneseq
      %v775 = vshrl.u32 %v774, 7
      %v776 = vsub.s32 0, %v775
      %v777 = vrot.slane %v772, %v776
      %v778 = vlaneseq
      %v779 = vshrl.u32 %v778, 7
      %v780 = vsub.s32 1, %v779
      %v781 = vrot.slane %v772, %v780
      %v792 = vunpack.c.l.b16 %v764
      %v793 = vunpack.c.h.b16 %v764
      %v794 = vunpack.c.l.b16 %v765
      %v795 = vunpack.c.h.b16 %v765
      %v796 = vunpack.c.l.b16 %v766
      %v797 = vunpack.c.h.b16 %v766
      %v798 = vunpack.c.l.b16 %v767
      %v799 = vunpack.c.h.b16 %v767
      %v800 = vunpack.c.l.b16 %v768
      %v801 = vunpack.c.h.b16 %v768
      %v802 = vunpack.c.l.b16 %v769
      %v803 = vunpack.c.h.b16 %v769
      %v804 = vunpack.c.l.b16 %v770
      %v805 = vunpack.c.h.b16 %v770
      %v806 = vunpack.c.l.b16 %v771
      %v807 = vunpack.c.h.b16 %v771
      %v808 = vpack.c.b16 %v794, %v792
      %v809 = vpack.c.b16 %v795, %v793
      %v810 = vpack.c.b16 %v798, %v796
      %v811 = vpack.c.b16 %v799, %v797
      %v812 = vpack.c.b16 %v802, %v800
      %v813 = vpack.c.b16 %v803, %v801
      %v814 = vpack.c.b16 %v806, %v804
      %v815 = vpack.c.b16 %v807, %v805
      %v825 = vsel %vm719, %v763, 0
      %827 = vmatprep.subr.bf16.mxu0 %v809
      %828 = vmatpush1.bf16.msra.mxu0 %v808
      %829 = vmatprep.subr.bf16.mxu0 %v811
      %830 = vmatpush1.bf16.msra.mxu0 %v810
      %831 = vmatprep.subr.bf16.mxu0 %v813
      %832 = vmatpush1.bf16.msra.mxu0 %v812
      %833 = vmatprep.subr.bf16.mxu0 %v815
      %834 = vmatpush1.bf16.msra.mxu0 %v814
      %835 = vmatprep.subr.bf16.mxu0 0
      %836 = vmatpush1.bf16.msra.mxu0 0
      %837 = vmatprep.subr.bf16.mxu0 0
      %838 = vmatpush1.bf16.msra.mxu0 0
      %839 = vmatprep.subr.bf16.mxu0 0
      %840 = vmatpush1.bf16.msra.mxu0 0
      %841 = vmatprep.subr.bf16.mxu0 0
      %842 = vmatpush1.bf16.msra.mxu0 0
      %843 = vmatprep.subr.bf16.mxu0 0
      %844 = vmatpush1.bf16.msra.mxu0 0
      %845 = vmatprep.subr.bf16.mxu0 0
      %846 = vmatpush1.bf16.msra.mxu0 0
      %847 = vmatprep.subr.bf16.mxu0 0
      %848 = vmatpush1.bf16.msra.mxu0 0
      %849 = vmatprep.subr.bf16.mxu0 0
      %850 = vmatpush1.bf16.msra.mxu0 0
      %851 = vmatprep.subr.bf16.mxu0 0
      %852 = vmatpush1.bf16.msra.mxu0 0
      %853 = vmatprep.subr.bf16.mxu0 0
      %854 = vmatpush1.bf16.msra.mxu0 0
      %855 = vmatprep.subr.bf16.mxu0 0
      %856 = vmatpush1.bf16.msra.mxu0 0
      %857 = vmatprep.subr.bf16.mxu0 0
      %858 = vmatpush1.bf16.msra.mxu0 0
      %859 = vmatprep.mubr.bf16.mxu0 0
      %860 = vmatmul.mubr.bf16.gmra.mrb[0].mxu0 %v825
      %v861 = vpop.f32.mrb[0].mxu0
      %v862 = vadd.f32 %v777, %v861
      %v863 = vpop.f32.mrb[0].mxu0
      %v864 = vadd.f32 %v781, %v863
      %v865 = vpop.f32.mrb[0].mxu0
      %v866 = vadd.f32 %v777, %v865
      %v867 = vpop.f32.mrb[0].mxu0
      %v868 = vadd.f32 %v781, %v867
      %869 = vdwg.mxu0
      %v870 = vpack.c.bf16 %v866, %v862
      %v871 = vpack.c.bf16 %v868, %v864
      %v872 = vlaneseq
      %v873 = vshrl.u32 %v872, 7
      %v874 = vadd.s32 %v873, 8
      %v875 = vlaneseq
      %v876 = vand.u32 %v875, 127
      %vm877 = vcmp.ge.s32.totalorder %v873, %v876
      %vm878 = vcmp.ge.s32.totalorder %v874, %v876
      %880 = vrot.lane.b32.xlu0 %v870, 64
      %v881 = vpop.permute.xlu0 %880
      %vm882 = vcmask 130048
      %v884 = vsel %vm882, %v870, 0
      %v887 = vsel %vm882, %v881, 0
      %889 = vmatprep.subr.bf16.mxu0 0
      %890 = vmatpush1.bf16.xpose.msra.mxu0 %v887
      %891 = vmatprep.subr.bf16.mxu0 0
      %892 = vmatpush1.bf16.xpose.msra.mxu0 0
      %893 = vmatprep.subr.bf16.mxu0 0
      %894 = vmatpush1.bf16.xpose.msra.mxu0 0
      %895 = vmatprep.subr.bf16.mxu0 0
      %896 = vmatpush1.bf16.xpose.msra.mxu0 0
      %897 = vmatprep.subr.bf16.mxu0 0
      %898 = vmatpush1.bf16.xpose.msra.mxu0 0
      %899 = vmatprep.subr.bf16.mxu0 0
      %900 = vmatpush1.bf16.xpose.msra.mxu0 0
      %901 = vmatprep.subr.bf16.mxu0 0
      %902 = vmatpush1.bf16.xpose.msra.mxu0 0
      %903 = vmatprep.subr.bf16.mxu0 0
      %904 = vmatpush1.bf16.xpose.msra.mxu0 0
      %905 = vmatprep.subr.bf16.mxu0 0
      %906 = vmatpush1.bf16.xpose.msra.mxu0 0
      %907 = vmatprep.subr.bf16.mxu0 0
      %908 = vmatpush1.bf16.xpose.msra.mxu0 0
      %909 = vmatprep.subr.bf16.mxu0 0
      %910 = vmatpush1.bf16.xpose.msra.mxu0 0
      %911 = vmatprep.subr.bf16.mxu0 0
      %912 = vmatpush1.bf16.xpose.msra.mxu0 0
      %913 = vmatprep.subr.bf16.mxu0 0
      %914 = vmatpush1.bf16.xpose.msra.mxu0 0
      %915 = vmatprep.subr.bf16.mxu0 0
      %916 = vmatpush1.bf16.xpose.msra.mxu0 0
      %917 = vmatprep.subr.bf16.mxu0 0
      %918 = vmatpush1.bf16.xpose.msra.mxu0 0
      %919 = vmatprep.subr.bf16.mxu0 0
      %920 = vmatpush1.bf16.xpose.msra.mxu0 0
      %921 = vmatprep.mubr.bf16.mxu0 0
      %922 = vmatmul.mubr.bf16.gmra.mrb[0].mxu0 %v884
      %v923 = vpop.f32.mrb[0].mxu0
      %v924 = vadd.f32 0.0, %v923
      %v925 = vpop.f32.mrb[0].mxu0
      %v926 = vpop.f32.mrb[0].mxu0
      %v927 = vadd.f32 0.0, %v926
      %v928 = vpop.f32.mrb[0].mxu0
      %929 = vdwg.mxu0
      %v930 = vmul.f32 %v924, 0.25
      %v931 = vmul.f32 %v927, 0.25
      %v932 = vsel %vm877, %v930, -1e+30
      %v933 = vsel %vm878, %v931, -1e+30
      %v934 = vsel %vm882, %v932, -inf
      %935 = vmax.xlane.f32.xlu0 %v934
      %v936 = vpop.xlane.xlu0 %935
      %v937 = vsel %vm882, %v933, -inf
      %938 = vmax.xlane.f32.xlu0 %v937
      %v939 = vpop.xlane.xlu0 %938
      %v940 = vsub.f32 %v932, %v936
      %v941 = vsub.f32 %v933, %v939
      %v942 = vpack.c.bf16 %v941, %v940
      %v944 = vmul.bf16 %v942, 1069105081
      %v945 = vpow.bf16.pop %v944
      %v946 = vunpack.c.l.bf16 %v945
      %v947 = vunpack.c.h.bf16 %v945
      %v948 = vsel %vm882, %v946, 0.0
      %949 = vadd.xlane.f32.xlu0 %v948
      %v950 = vpop.xlane.xlu0 %949
      %v951 = vsel %vm882, %v947, 0.0
      %952 = vadd.xlane.f32.xlu0 %v951
      %v953 = vpop.xlane.xlu0 %952
      %v955 = vsel %vm882, %v945, 0
      %957 = vmatprep.subr.bf16.mxu0 0
      %958 = vmatpush1.bf16.msra.mxu0 %v871
      %959 = vmatprep.subr.bf16.mxu0 0
      %960 = vmatpush1.bf16.msra.mxu0 0
      %961 = vmatprep.subr.bf16.mxu0 0
      %962 = vmatpush1.bf16.msra.mxu0 0
      %963 = vmatprep.subr.bf16.mxu0 0
      %964 = vmatpush1.bf16.msra.mxu0 0
      %965 = vmatprep.subr.bf16.mxu0 0
      %966 = vmatpush1.bf16.msra.mxu0 0
      %967 = vmatprep.subr.bf16.mxu0 0
      %968 = vmatpush1.bf16.msra.mxu0 0
      %969 = vmatprep.subr.bf16.mxu0 0
      %970 = vmatpush1.bf16.msra.mxu0 0
      %971 = vmatprep.subr.bf16.mxu0 0
      %972 = vmatpush1.bf16.msra.mxu0 0
      %973 = vmatprep.subr.bf16.mxu0 0
      %974 = vmatpush1.bf16.msra.mxu0 0
      %975 = vmatprep.subr.bf16.mxu0 0
      %976 = vmatpush1.bf16.msra.mxu0 0
      %977 = vmatprep.subr.bf16.mxu0 0
      %978 = vmatpush1.bf16.msra.mxu0 0
      %979 = vmatprep.subr.bf16.mxu0 0
      %980 = vmatpush1.bf16.msra.mxu0 0
      %981 = vmatprep.subr.bf16.mxu0 0
      %982 = vmatpush1.bf16.msra.mxu0 0
      %983 = vmatprep.subr.bf16.mxu0 0
      %984 = vmatpush1.bf16.msra.mxu0 0
      %985 = vmatprep.subr.bf16.mxu0 0
      %986 = vmatpush1.bf16.msra.mxu0 0
      %987 = vmatprep.subr.bf16.mxu0 0
      %988 = vmatpush1.bf16.msra.mxu0 0
      %989 = vmatprep.mubr.bf16.mxu0 0
      %990 = vmatmul.mubr.bf16.gmra.mrb[0].mxu0 %v955
      %v991 = vpop.f32.mrb[0].mxu0
      %v992 = vadd.f32 0.0, %v991
      %v993 = vpop.f32.mrb[0].mxu0
      %v994 = vpop.f32.mrb[0].mxu0
      %v995 = vadd.f32 0.0, %v994
      %v996 = vpop.f32.mrb[0].mxu0
      %997 = vdwg.mxu0
      %v998 = vrcp.pop %v950
      %v999 = vrcp.pop %v953
      %v1000 = vmul.f32 %v992, %v998
      %v1001 = vmul.f32 %v995, %v999
      %v1002 = vpack.c.bf16 %v1001, %v1000
      %1003 = vst.msk [vmem:[#allocation3] sm:$0xff] %vm882, %v1002
      %1004 = vrot.lane.b32.xlu0 %v870, 112
      %v1005 = vpop.permute.xlu0 %1004
      %1006 = vrot.lane.b32.xlu0 %v870, 48
      %v1007 = vpop.permute.xlu0 %1006
      %v1009 = vsel %vm882, %v1005, 0
      %v1012 = vsel %vm882, %v1007, 0
      %1014 = vmatprep.subr.bf16.mxu0 0
      %1015 = vmatpush1.bf16.xpose.msra.mxu0 %v1012
      %1016 = vmatprep.subr.bf16.mxu0 0
      %1017 = vmatpush1.bf16.xpose.msra.mxu0 0
      %1018 = vmatprep.subr.bf16.mxu0 0
      %1019 = vmatpush1.bf16.xpose.msra.mxu0 0
      %1020 = vmatprep.subr.bf16.mxu0 0
      %1021 = vmatpush1.bf16.xpose.msra.mxu0 0
      %1022 = vmatprep.subr.bf16.mxu0 0
      %1023 = vmatpush1.bf16.xpose.msra.mxu0 0
      %1024 = vmatprep.subr.bf16.mxu0 0
      %1025 = vmatpush1.bf16.xpose.msra.mxu0 0
      %1026 = vmatprep.subr.bf16.mxu0 0
      %1027 = vmatpush1.bf16.xpose.msra.mxu0 0
      %1028 = vmatprep.subr.bf16.mxu0 0
      %1029 = vmatpush1.bf16.xpose.msra.mxu0 0
      %1030 = vmatprep.subr.bf16.mxu0 0
      %1031 = vmatpush1.bf16.xpose.msra.mxu0 0
      %1032 = vmatprep.subr.bf16.mxu0 0
      %1033 = vmatpush1.bf16.xpose.msra.mxu0 0
      %1034 = vmatprep.subr.bf16.mxu0 0
      %1035 = vmatpush1.bf16.xpose.msra.mxu0 0
      %1036 = vmatprep.subr.bf16.mxu0 0
      %1037 = vmatpush1.bf16.xpose.msra.mxu0 0
      %1038 = vmatprep.subr.bf16.mxu0 0
      %1039 = vmatpush1.bf16.xpose.msra.mxu0 0
      %1040 = vmatprep.subr.bf16.mxu0 0
      %1041 = vmatpush1.bf16.xpose.msra.mxu0 0
      %1042 = vmatprep.subr.bf16.mxu0 0
      %1043 = vmatpush1.bf16.xpose.msra.mxu0 0
      %1044 = vmatprep.subr.bf16.mxu0 0
      %1045 = vmatpush1.bf16.xpose.msra.mxu0 0
      %1046 = vmatprep.mubr.bf16.mxu0 0
      %1047 = vmatmul.mubr.bf16.gmra.mrb[0].mxu0 %v1009
      %v1048 = vpop.f32.mrb[0].mxu0
      %v1049 = vadd.f32 0.0, %v1048
      %v1050 = vpop.f32.mrb[0].mxu0
      %v1051 = vpop.f32.mrb[0].mxu0
      %v1052 = vadd.f32 0.0, %v1051
      %v1053 = vpop.f32.mrb[0].mxu0
      %1054 = vdwg.mxu0
      %v1055 = vmul.f32 %v1049, 0.25
      %v1056 = vmul.f32 %v1052, 0.25
      %v1057 = vsel %vm877, %v1055, -1e+30
      %v1058 = vsel %vm878, %v1056, -1e+30
      %v1059 = vsel %vm882, %v1057, -inf
      %1060 = vmax.xlane.f32.xlu0 %v1059
      %v1061 = vpop.xlane.xlu0 %1060
      %v1062 = vsel %vm882, %v1058, -inf
      %1063 = vmax.xlane.f32.xlu0 %v1062
      %v1064 = vpop.xlane.xlu0 %1063
      %v1065 = vsub.f32 %v1057, %v1061
      %v1066 = vsub.f32 %v1058, %v1064
      %v1067 = vpack.c.bf16 %v1066, %v1065
      %v1069 = vmul.bf16 %v1067, 1069105081
      %v1070 = vpow.bf16.pop %v1069
      %v1071 = vunpack.c.l.bf16 %v1070
      %v1072 = vunpack.c.h.bf16 %v1070
      %v1073 = vsel %vm882, %v1071, 0.0
      %1074 = vadd.xlane.f32.xlu0 %v1073
      %v1075 = vpop.xlane.xlu0 %1074
      %v1076 = vsel %vm882, %v1072, 0.0
      %1077 = vadd.xlane.f32.xlu0 %v1076
      %v1078 = vpop.xlane.xlu0 %1077
      %1080 = vrot.lane.b32.xlu0 %v871, 112
      %v1081 = vpop.permute.xlu0 %1080
      %v1084 = vsel %vm882, %v1070, 0
      %1086 = vmatprep.subr.bf16.mxu0 0
      %1087 = vmatpush1.bf16.msra.mxu0 %v1081
      %1088 = vmatprep.subr.bf16.mxu0 0
      %1089 = vmatpush1.bf16.msra.mxu0 0
      %1090 = vmatprep.subr.bf16.mxu0 0
      %1091 = vmatpush1.bf16.msra.mxu0 0
      %1092 = vmatprep.subr.bf16.mxu0 0
      %1093 = vmatpush1.bf16.msra.mxu0 0
      %1094 = vmatprep.subr.bf16.mxu0 0
      %1095 = vmatpush1.bf16.msra.mxu0 0
      %1096 = vmatprep.subr.bf16.mxu0 0
      %1097 = vmatpush1.bf16.msra.mxu0 0
      %1098 = vmatprep.subr.bf16.mxu0 0
      %1099 = vmatpush1.bf16.msra.mxu0 0
      %1100 = vmatprep.subr.bf16.mxu0 0
      %1101 = vmatpush1.bf16.msra.mxu0 0
      %1102 = vmatprep.subr.bf16.mxu0 0
      %1103 = vmatpush1.bf16.msra.mxu0 0
      %1104 = vmatprep.subr.bf16.mxu0 0
      %1105 = vmatpush1.bf16.msra.mxu0 0
      %1106 = vmatprep.subr.bf16.mxu0 0
      %1107 = vmatpush1.bf16.msra.mxu0 0
      %1108 = vmatprep.subr.bf16.mxu0 0
      %1109 = vmatpush1.bf16.msra.mxu0 0
      %1110 = vmatprep.subr.bf16.mxu0 0
      %1111 = vmatpush1.bf16.msra.mxu0 0
      %1112 = vmatprep.subr.bf16.mxu0 0
      %1113 = vmatpush1.bf16.msra.mxu0 0
      %1114 = vmatprep.subr.bf16.mxu0 0
      %1115 = vmatpush1.bf16.msra.mxu0 0
      %1116 = vmatprep.subr.bf16.mxu0 0
      %1117 = vmatpush1.bf16.msra.mxu0 0
      %1118 = vmatprep.mubr.bf16.mxu0 0
      %1119 = vmatmul.mubr.bf16.gmra.mrb[0].mxu0 %v1084
      %v1120 = vpop.f32.mrb[0].mxu0
      %v1121 = vadd.f32 0.0, %v1120
      %v1122 = vpop.f32.mrb[0].mxu0
      %v1123 = vpop.f32.mrb[0].mxu0
      %v1124 = vadd.f32 0.0, %v1123
      %v1125 = vpop.f32.mrb[0].mxu0
      %1126 = vdwg.mxu0
      %v1127 = vrcp.pop %v1075
      %v1128 = vrcp.pop %v1078
      %v1129 = vmul.f32 %v1121, %v1127
      %v1130 = vmul.f32 %v1124, %v1128
      %v1131 = vpack.c.bf16 %v1130, %v1129
      %1133 = vrot.lane.b32.xlu0 %v1131, 16
      %v1134 = vpop.permute.xlu0 %1133
      %vm1136 = vcmask 261248
      %1137 = vst.msk [vmem:[#allocation3] sm:$0xff] %vm1136, %v1134
      %1138 = vrot.lane.b32.xlu0 %v870, 96
      %v1139 = vpop.permute.xlu0 %1138
      %1140 = vrot.lane.b32.xlu0 %v870, 32
      %v1141 = vpop.permute.xlu0 %1140
      %v1143 = vsel %vm882, %v1139, 0
      %v1146 = vsel %vm882, %v1141, 0
      %1148 = vmatprep.subr.bf16.mxu0 0
      %1149 = vmatpush1.bf16.xpose.msra.mxu0 %v1146
      %1150 = vmatprep.subr.bf16.mxu0 0
      %1151 = vmatpush1.bf16.xpose.msra.mxu0 0
      %1152 = vmatprep.subr.bf16.mxu0 0
      %1153 = vmatpush1.bf16.xpose.msra.mxu0 0
      %1154 = vmatprep.subr.bf16.mxu0 0
      %1155 = vmatpush1.bf16.xpose.msra.mxu0 0
      %1156 = vmatprep.subr.bf16.mxu0 0
      %1157 = vmatpush1.bf16.xpose.msra.mxu0 0
      %1158 = vmatprep.subr.bf16.mxu0 0
      %1159 = vmatpush1.bf16.xpose.msra.mxu0 0
      %1160 = vmatprep.subr.bf16.mxu0 0
      %1161 = vmatpush1.bf16.xpose.msra.mxu0 0
      %1162 = vmatprep.subr.bf16.mxu0 0
      %1163 = vmatpush1.bf16.xpose.msra.mxu0 0
      %1164 = vmatprep.subr.bf16.mxu0 0
      %1165 = vmatpush1.bf16.xpose.msra.mxu0 0
      %1166 = vmatprep.subr.bf16.mxu0 0
      %1167 = vmatpush1.bf16.xpose.msra.mxu0 0
      %1168 = vmatprep.subr.bf16.mxu0 0
      %1169 = vmatpush1.bf16.xpose.msra.mxu0 0
      %1170 = vmatprep.subr.bf16.mxu0 0
      %1171 = vmatpush1.bf16.xpose.msra.mxu0 0
      %1172 = vmatprep.subr.bf16.mxu0 0
      %1173 = vmatpush1.bf16.xpose.msra.mxu0 0
      %1174 = vmatprep.subr.bf16.mxu0 0
      %1175 = vmatpush1.bf16.xpose.msra.mxu0 0
      %1176 = vmatprep.subr.bf16.mxu0 0
      %1177 = vmatpush1.bf16.xpose.msra.mxu0 0
      %1178 = vmatprep.subr.bf16.mxu0 0
      %1179 = vmatpush1.bf16.xpose.msra.mxu0 0
      %1180 = vmatprep.mubr.bf16.mxu0 0
      %1181 = vmatmul.mubr.bf16.gmra.mrb[0].mxu0 %v1143
      %v1182 = vpop.f32.mrb[0].mxu0
      %v1183 = vadd.f32 0.0, %v1182
      %v1184 = vpop.f32.mrb[0].mxu0
      %v1185 = vpop.f32.mrb[0].mxu0
      %v1186 = vadd.f32 0.0, %v1185
      %v1187 = vpop.f32.mrb[0].mxu0
      %1188 = vdwg.mxu0
      %v1189 = vmul.f32 %v1183, 0.25
      %v1190 = vmul.f32 %v1186, 0.25
      %v1191 = vsel %vm877, %v1189, -1e+30
      %v1192 = vsel %vm878, %v1190, -1e+30
      %v1193 = vsel %vm882, %v1191, -inf
      %1194 = vmax.xlane.f32.xlu0 %v1193
      %v1195 = vpop.xlane.xlu0 %1194
      %v1196 = vsel %vm882, %v1192, -inf
      %1197 = vmax.xlane.f32.xlu0 %v1196
      %v1198 = vpop.xlane.xlu0 %1197
      %v1199 = vsub.f32 %v1191, %v1195
      %v1200 = vsub.f32 %v1192, %v1198
      %v1201 = vpack.c.bf16 %v1200, %v1199
      %v1203 = vmul.bf16 %v1201, 1069105081
      %v1204 = vpow.bf16.pop %v1203
      %v1205 = vunpack.c.l.bf16 %v1204
      %v1206 = vunpack.c.h.bf16 %v1204
      %v1207 = vsel %vm882, %v1205, 0.0
      %1208 = vadd.xlane.f32.xlu0 %v1207
      %v1209 = vpop.xlane.xlu0 %1208
      %v1210 = vsel %vm882, %v1206, 0.0
      %1211 = vadd.xlane.f32.xlu0 %v1210
      %v1212 = vpop.xlane.xlu0 %1211
      %1213 = vrot.lane.b32.xlu0 %v871, 96
      %v1214 = vpop.permute.xlu0 %1213
      %v1217 = vsel %vm882, %v1204, 0
      %1219 = vmatprep.subr.bf16.mxu0 0
      %1220 = vmatpush1.bf16.msra.mxu0 %v1214
      %1221 = vmatprep.subr.bf16.mxu0 0
      %1222 = vmatpush1.bf16.msra.mxu0 0
      %1223 = vmatprep.subr.bf16.mxu0 0
      %1224 = vmatpush1.bf16.msra.mxu0 0
      %1225 = vmatprep.subr.bf16.mxu0 0
      %1226 = vmatpush1.bf16.msra.mxu0 0
      %1227 = vmatprep.subr.bf16.mxu0 0
      %1228 = vmatpush1.bf16.msra.mxu0 0
      %1229 = vmatprep.subr.bf16.mxu0 0
      %1230 = vmatpush1.bf16.msra.mxu0 0
      %1231 = vmatprep.subr.bf16.mxu0 0
      %1232 = vmatpush1.bf16.msra.mxu0 0
      %1233 = vmatprep.subr.bf16.mxu0 0
      %1234 = vmatpush1.bf16.msra.mxu0 0
      %1235 = vmatprep.subr.bf16.mxu0 0
      %1236 = vmatpush1.bf16.msra.mxu0 0
      %1237 = vmatprep.subr.bf16.mxu0 0
      %1238 = vmatpush1.bf16.msra.mxu0 0
      %1239 = vmatprep.subr.bf16.mxu0 0
      %1240 = vmatpush1.bf16.msra.mxu0 0
      %1241 = vmatprep.subr.bf16.mxu0 0
      %1242 = vmatpush1.bf16.msra.mxu0 0
      %1243 = vmatprep.subr.bf16.mxu0 0
      %1244 = vmatpush1.bf16.msra.mxu0 0
      %1245 = vmatprep.subr.bf16.mxu0 0
      %1246 = vmatpush1.bf16.msra.mxu0 0
      %1247 = vmatprep.subr.bf16.mxu0 0
      %1248 = vmatpush1.bf16.msra.mxu0 0
      %1249 = vmatprep.subr.bf16.mxu0 0
      %1250 = vmatpush1.bf16.msra.mxu0 0
      %1251 = vmatprep.mubr.bf16.mxu0 0
      %1252 = vmatmul.mubr.bf16.gmra.mrb[0].mxu0 %v1217
      %v1253 = vpop.f32.mrb[0].mxu0
      %v1254 = vadd.f32 0.0, %v1253
      %v1255 = vpop.f32.mrb[0].mxu0
      %v1256 = vpop.f32.mrb[0].mxu0
      %v1257 = vadd.f32 0.0, %v1256
      %v1258 = vpop.f32.mrb[0].mxu0
      %1259 = vdwg.mxu0
      %v1260 = vrcp.pop %v1209
      %v1261 = vrcp.pop %v1212
      %v1262 = vmul.f32 %v1254, %v1260
      %v1263 = vmul.f32 %v1257, %v1261
      %v1264 = vpack.c.bf16 %v1263, %v1262
      %1266 = vrot.lane.b32.xlu0 %v1264, 32
      %v1267 = vpop.permute.xlu0 %1266
      %vm1269 = vcmask 392448
      %1270 = vst.msk [vmem:[#allocation3] sm:$0xff] %vm1269, %v1267
      %1271 = vrot.lane.b32.xlu0 %v870, 80
      %v1272 = vpop.permute.xlu0 %1271
      %1273 = vrot.lane.b32.xlu0 %v870, 16
      %v1274 = vpop.permute.xlu0 %1273
      %v1276 = vsel %vm882, %v1272, 0
      %v1279 = vsel %vm882, %v1274, 0
      %1281 = vmatprep.subr.bf16.mxu0 0
      %1282 = vmatpush1.bf16.xpose.msra.mxu0 %v1279
      %1283 = vmatprep.subr.bf16.mxu0 0
      %1284 = vmatpush1.bf16.xpose.msra.mxu0 0
      %1285 = vmatprep.subr.bf16.mxu0 0
      %1286 = vmatpush1.bf16.xpose.msra.mxu0 0
      %1287 = vmatprep.subr.bf16.mxu0 0
      %1288 = vmatpush1.bf16.xpose.msra.mxu0 0
      %1289 = vmatprep.subr.bf16.mxu0 0
      %1290 = vmatpush1.bf16.xpose.msra.mxu0 0
      %1291 = vmatprep.subr.bf16.mxu0 0
      %1292 = vmatpush1.bf16.xpose.msra.mxu0 0
      %1293 = vmatprep.subr.bf16.mxu0 0
      %1294 = vmatpush1.bf16.xpose.msra.mxu0 0
      %1295 = vmatprep.subr.bf16.mxu0 0
      %1296 = vmatpush1.bf16.xpose.msra.mxu0 0
      %1297 = vmatprep.subr.bf16.mxu0 0
      %1298 = vmatpush1.bf16.xpose.msra.mxu0 0
      %1299 = vmatprep.subr.bf16.mxu0 0
      %1300 = vmatpush1.bf16.xpose.msra.mxu0 0
      %1301 = vmatprep.subr.bf16.mxu0 0
      %1302 = vmatpush1.bf16.xpose.msra.mxu0 0
      %1303 = vmatprep.subr.bf16.mxu0 0
      %1304 = vmatpush1.bf16.xpose.msra.mxu0 0
      %1305 = vmatprep.subr.bf16.mxu0 0
      %1306 = vmatpush1.bf16.xpose.msra.mxu0 0
      %1307 = vmatprep.subr.bf16.mxu0 0
      %1308 = vmatpush1.bf16.xpose.msra.mxu0 0
      %1309 = vmatprep.subr.bf16.mxu0 0
      %1310 = vmatpush1.bf16.xpose.msra.mxu0 0
      %1311 = vmatprep.subr.bf16.mxu0 0
      %1312 = vmatpush1.bf16.xpose.msra.mxu0 0
      %1313 = vmatprep.mubr.bf16.mxu0 0
      %1314 = vmatmul.mubr.bf16.gmra.mrb[0].mxu0 %v1276
      %v1315 = vpop.f32.mrb[0].mxu0
      %v1316 = vadd.f32 0.0, %v1315
      %v1317 = vpop.f32.mrb[0].mxu0
      %v1318 = vpop.f32.mrb[0].mxu0
      %v1319 = vadd.f32 0.0, %v1318
      %v1320 = vpop.f32.mrb[0].mxu0
      %1321 = vdwg.mxu0
      %v1322 = vmul.f32 %v1316, 0.25
      %v1323 = vmul.f32 %v1319, 0.25
      %v1324 = vsel %vm877, %v1322, -1e+30
      %v1325 = vsel %vm878, %v1323, -1e+30
      %v1326 = vsel %vm882, %v1324, -inf
      %1327 = vmax.xlane.f32.xlu0 %v1326
      %v1328 = vpop.xlane.xlu0 %1327
      %v1329 = vsel %vm882, %v1325, -inf
      %1330 = vmax.xlane.f32.xlu0 %v1329
      %v1331 = vpop.xlane.xlu0 %1330
      %v1332 = vsub.f32 %v1324, %v1328
      %v1333 = vsub.f32 %v1325, %v1331
      %v1334 = vpack.c.bf16 %v1333, %v1332
      %v1336 = vmul.bf16 %v1334, 1069105081
      %v1337 = vpow.bf16.pop %v1336
      %v1338 = vunpack.c.l.bf16 %v1337
      %v1339 = vunpack.c.h.bf16 %v1337
      %v1340 = vsel %vm882, %v1338, 0.0
      %1341 = vadd.xlane.f32.xlu0 %v1340
      %v1342 = vpop.xlane.xlu0 %1341
      %v1343 = vsel %vm882, %v1339, 0.0
      %1344 = vadd.xlane.f32.xlu0 %v1343
      %v1345 = vpop.xlane.xlu0 %1344
      %1346 = vrot.lane.b32.xlu0 %v871, 80
      %v1347 = vpop.permute.xlu0 %1346
      %v1350 = vsel %vm882, %v1337, 0
      %1352 = vmatprep.subr.bf16.mxu0 0
      %1353 = vmatpush1.bf16.msra.mxu0 %v1347
      %1354 = vmatprep.subr.bf16.mxu0 0
      %1355 = vmatpush1.bf16.msra.mxu0 0
      %1356 = vmatprep.subr.bf16.mxu0 0
      %1357 = vmatpush1.bf16.msra.mxu0 0
      %1358 = vmatprep.subr.bf16.mxu0 0
      %1359 = vmatpush1.bf16.msra.mxu0 0
      %1360 = vmatprep.subr.bf16.mxu0 0
      %1361 = vmatpush1.bf16.msra.mxu0 0
      %1362 = vmatprep.subr.bf16.mxu0 0
      %1363 = vmatpush1.bf16.msra.mxu0 0
      %1364 = vmatprep.subr.bf16.mxu0 0
      %1365 = vmatpush1.bf16.msra.mxu0 0
      %1366 = vmatprep.subr.bf16.mxu0 0
      %1367 = vmatpush1.bf16.msra.mxu0 0
      %1368 = vmatprep.subr.bf16.mxu0 0
      %1369 = vmatpush1.bf16.msra.mxu0 0
      %1370 = vmatprep.subr.bf16.mxu0 0
      %1371 = vmatpush1.bf16.msra.mxu0 0
      %1372 = vmatprep.subr.bf16.mxu0 0
      %1373 = vmatpush1.bf16.msra.mxu0 0
      %1374 = vmatprep.subr.bf16.mxu0 0
      %1375 = vmatpush1.bf16.msra.mxu0 0
      %1376 = vmatprep.subr.bf16.mxu0 0
      %1377 = vmatpush1.bf16.msra.mxu0 0
      %1378 = vmatprep.subr.bf16.mxu0 0
      %1379 = vmatpush1.bf16.msra.mxu0 0
      %1380 = vmatprep.subr.bf16.mxu0 0
      %1381 = vmatpush1.bf16.msra.mxu0 0
      %1382 = vmatprep.subr.bf16.mxu0 0
      %1383 = vmatpush1.bf16.msra.mxu0 0
      %1384 = vmatprep.mubr.bf16.mxu0 0
      %1385 = vmatmul.mubr.bf16.gmra.mrb[0].mxu0 %v1350
      %v1386 = vpop.f32.mrb[0].mxu0
      %v1387 = vadd.f32 0.0, %v1386
      %v1388 = vpop.f32.mrb[0].mxu0
      %v1389 = vpop.f32.mrb[0].mxu0
      %v1390 = vadd.f32 0.0, %v1389
      %v1391 = vpop.f32.mrb[0].mxu0
      %1392 = vdwg.mxu0
      %v1393 = vrcp.pop %v1342
      %v1394 = vrcp.pop %v1345
      %v1395 = vmul.f32 %v1387, %v1393
      %v1396 = vmul.f32 %v1390, %v1394
      %v1397 = vpack.c.bf16 %v1396, %v1395
      %1399 = vrot.lane.b32.xlu0 %v1397, 48
      %v1400 = vpop.permute.xlu0 %1399
      %vm1402 = vcmask 523648
      %1403 = vst.msk [vmem:[#allocation3] sm:$0xff] %vm1402, %v1400
      %v1404 = vld [vmem:[#allocation3] sm:$0xff]
      %v1405 = vld [vmem:[%s673] sm:$0xf]
      %v1406 = vld [vmem:[%s673 + $0x4] sm:$0xf]
      %v1407 = vld [vmem:[%s673 + $0x8] sm:$0xf]
      %v1408 = vld [vmem:[%s673 + $0xc] sm:$0xf]
      %v1409 = vld [vmem:[%s673 + $0x10] sm:$0xf]
      %v1410 = vld [vmem:[%s673 + $0x14] sm:$0xf]
      %v1411 = vld [vmem:[%s673 + $0x18] sm:$0xf]
      %v1412 = vld [vmem:[%s673 + $0x1c] sm:$0xf]
      %v1413 = vld [vmem:[%s676] sm:$0x1]
      %v1415 = vlaneseq
      %v1416 = vshrl.u32 %v1415, 7
      %v1417 = vsub.s32 0, %v1416
      %v1418 = vrot.slane %v1413, %v1417
      %v1428 = vunpack.c.l.b16 %v1405
      %v1429 = vunpack.c.l.b16 %v1406
      %v1430 = vunpack.c.l.b16 %v1407
      %v1431 = vunpack.c.l.b16 %v1408
      %v1432 = vunpack.c.l.b16 %v1409
      %v1433 = vunpack.c.l.b16 %v1410
      %v1434 = vunpack.c.l.b16 %v1411
      %v1435 = vunpack.c.l.b16 %v1412
      %v1436 = vpack.c.b16 %v1429, %v1428
      %v1437 = vpack.c.b16 %v1431, %v1430
      %v1438 = vpack.c.b16 %v1433, %v1432
      %v1439 = vpack.c.b16 %v1435, %v1434
      %v1445 = vsel %vm719, %v1404, 0
      %1447 = vmatprep.subr.bf16.mxu0 0
      %1448 = vmatpush1.bf16.msra.mxu0 %v1436
      %1449 = vmatprep.subr.bf16.mxu0 0
      %1450 = vmatpush1.bf16.msra.mxu0 %v1437
      %1451 = vmatprep.subr.bf16.mxu0 0
      %1452 = vmatpush1.bf16.msra.mxu0 %v1438
      %1453 = vmatprep.subr.bf16.mxu0 0
      %1454 = vmatpush1.bf16.msra.mxu0 %v1439
      %1455 = vmatprep.subr.bf16.mxu0 0
      %1456 = vmatpush1.bf16.msra.mxu0 0
      %1457 = vmatprep.subr.bf16.mxu0 0
      %1458 = vmatpush1.bf16.msra.mxu0 0
      %1459 = vmatprep.subr.bf16.mxu0 0
      %1460 = vmatpush1.bf16.msra.mxu0 0
      %1461 = vmatprep.subr.bf16.mxu0 0
      %1462 = vmatpush1.bf16.msra.mxu0 0
      %1463 = vmatprep.subr.bf16.mxu0 0
      %1464 = vmatpush1.bf16.msra.mxu0 0
      %1465 = vmatprep.subr.bf16.mxu0 0
      %1466 = vmatpush1.bf16.msra.mxu0 0
      %1467 = vmatprep.subr.bf16.mxu0 0
      %1468 = vmatpush1.bf16.msra.mxu0 0
      %1469 = vmatprep.subr.bf16.mxu0 0
      %1470 = vmatpush1.bf16.msra.mxu0 0
      %1471 = vmatprep.subr.bf16.mxu0 0
      %1472 = vmatpush1.bf16.msra.mxu0 0
      %1473 = vmatprep.subr.bf16.mxu0 0
      %1474 = vmatpush1.bf16.msra.mxu0 0
      %1475 = vmatprep.subr.bf16.mxu0 0
      %1476 = vmatpush1.bf16.msra.mxu0 0
      %1477 = vmatprep.subr.bf16.mxu0 0
      %1478 = vmatpush1.bf16.msra.mxu0 0
      %1479 = vmatprep.mubr.bf16.mxu0 0
      %1480 = vmatmul.mubr.bf16.gmra.mrb[0].mxu0 %v1445
      %v1481 = vpop.f32.mrb[0].mxu0
      %v1482 = vadd.f32 %v1418, %v1481
      %v1483 = vpop.f32.mrb[0].mxu0
      %v1484 = vpop.f32.mrb[0].mxu0
      %v1485 = vadd.f32 %v1418, %v1484
      %v1486 = vpop.f32.mrb[0].mxu0
      %1487 = vdwg.mxu0
      %v1488 = vadd.f32 %v715, %v1482
      %v1489 = vadd.f32 %v716, %v1485
      %v1490 = vld [vmem:[%s679] sm:$0x1]
      %v1491 = vld [vmem:[%s682] sm:$0x1]
      %v1492 = vsel %vm719, %v1488, 0.0
      %1493 = vadd.xlane.f32.xlu0 %v1492
      %v1494 = vpop.xlane.xlu0 %1493
      %v1495 = vsel %vm719, %v1489, 0.0
      %1496 = vadd.xlane.f32.xlu0 %v1495
      %v1497 = vpop.xlane.xlu0 %1496
      %v1498 = vmul.f32 %v1494, %v726
      %v1499 = vmul.f32 %v1497, %v726
      %v1500 = vsub.f32 %v1488, %v1498
      %v1501 = vsub.f32 %v1489, %v1499
      %v1502 = vmul.f32 %v1500, %v1500
      %v1503 = vmul.f32 %v1501, %v1501
      %v1504 = vsel %vm719, %v1502, 0.0
      %1505 = vadd.xlane.f32.xlu0 %v1504
      %v1506 = vpop.xlane.xlu0 %1505
      %v1507 = vsel %vm719, %v1503, 0.0
      %1508 = vadd.xlane.f32.xlu0 %v1507
      %v1509 = vpop.xlane.xlu0 %1508
      %v1510 = vmul.f32 %v1506, %v726
      %v1511 = vmul.f32 %v1509, %v726
      %v1512 = vadd.f32 %v1510, 1e-05
      %v1513 = vadd.f32 %v1511, 1e-05
      %v1514 = vrsqrt.pop %v1512
      %v1515 = vrsqrt.pop %v1513
      %v1516 = vmul.f32 %v1500, %v1514
      %v1517 = vmul.f32 %v1501, %v1515
      %v1519 = vlaneseq
      %v1520 = vshrl.u32 %v1519, 7
      %v1521 = vsub.s32 0, %v1520
      %v1522 = vrot.slane %v1490, %v1521
      %v1524 = vmul.f32 %v1516, %v1522
      %v1525 = vmul.f32 %v1517, %v1522
      %v1527 = vlaneseq
      %v1528 = vshrl.u32 %v1527, 7
      %v1529 = vsub.s32 0, %v1528
      %v1530 = vrot.slane %v1491, %v1529
      %v1532 = vadd.f32 %v1524, %v1530
      %v1533 = vadd.f32 %v1525, %v1530
      %v1534 = vpack.c.bf16 %v1533, %v1532
      %v1535 = vld [vmem:[%s687] sm:$0xff]
      %v1536 = vld [vmem:[%s687 + $0x8] sm:$0xff]
      %v1537 = vld [vmem:[%s687 + $0x10] sm:$0xff]
      %v1538 = vld [vmem:[%s687 + $0x18] sm:$0xff]
      %v1539 = vld [vmem:[%s687 + $0x20] sm:$0xff]
      %v1540 = vld [vmem:[%s687 + $0x28] sm:$0xff]
      %v1541 = vld [vmem:[%s687 + $0x30] sm:$0xff]
      %v1542 = vld [vmem:[%s687 + $0x38] sm:$0xff]
      %v1543 = vld [vmem:[%s691] sm:$0x3]
      %v1545 = vlaneseq
      %v1546 = vshrl.u32 %v1545, 7
      %v1547 = vsub.s32 0, %v1546
      %v1548 = vrot.slane %v1543, %v1547
      %v1549 = vlaneseq
      %v1550 = vshrl.u32 %v1549, 7
      %v1551 = vsub.s32 1, %v1550
      %v1552 = vrot.slane %v1543, %v1551
      %v1563 = vunpack.c.l.b16 %v1535
      %v1564 = vunpack.c.h.b16 %v1535
      %v1565 = vunpack.c.l.b16 %v1536
      %v1566 = vunpack.c.h.b16 %v1536
      %v1567 = vunpack.c.l.b16 %v1537
      %v1568 = vunpack.c.h.b16 %v1537
      %v1569 = vunpack.c.l.b16 %v1538
      %v1570 = vunpack.c.h.b16 %v1538
      %v1571 = vunpack.c.l.b16 %v1539
      %v1572 = vunpack.c.h.b16 %v1539
      %v1573 = vunpack.c.l.b16 %v1540
      %v1574 = vunpack.c.h.b16 %v1540
      %v1575 = vunpack.c.l.b16 %v1541
      %v1576 = vunpack.c.h.b16 %v1541
      %v1577 = vunpack.c.l.b16 %v1542
      %v1578 = vunpack.c.h.b16 %v1542
      %v1579 = vpack.c.b16 %v1565, %v1563
      %v1580 = vpack.c.b16 %v1566, %v1564
      %v1581 = vpack.c.b16 %v1569, %v1567
      %v1582 = vpack.c.b16 %v1570, %v1568
      %v1583 = vpack.c.b16 %v1573, %v1571
      %v1584 = vpack.c.b16 %v1574, %v1572
      %v1585 = vpack.c.b16 %v1577, %v1575
      %v1586 = vpack.c.b16 %v1578, %v1576
      %v1596 = vsel %vm719, %v1534, 0
      %1598 = vmatprep.subr.bf16.mxu0 %v1580
      %1599 = vmatpush1.bf16.msra.mxu0 %v1579
      %1600 = vmatprep.subr.bf16.mxu0 %v1582
      %1601 = vmatpush1.bf16.msra.mxu0 %v1581
      %1602 = vmatprep.subr.bf16.mxu0 %v1584
      %1603 = vmatpush1.bf16.msra.mxu0 %v1583
      %1604 = vmatprep.subr.bf16.mxu0 %v1586
      %1605 = vmatpush1.bf16.msra.mxu0 %v1585
      %1606 = vmatprep.subr.bf16.mxu0 0
      %1607 = vmatpush1.bf16.msra.mxu0 0
      %1608 = vmatprep.subr.bf16.mxu0 0
      %1609 = vmatpush1.bf16.msra.mxu0 0
      %1610 = vmatprep.subr.bf16.mxu0 0
      %1611 = vmatpush1.bf16.msra.mxu0 0
      %1612 = vmatprep.subr.bf16.mxu0 0
      %1613 = vmatpush1.bf16.msra.mxu0 0
      %1614 = vmatprep.subr.bf16.mxu0 0
      %1615 = vmatpush1.bf16.msra.mxu0 0
      %1616 = vmatprep.subr.bf16.mxu0 0
      %1617 = vmatpush1.bf16.msra.mxu0 0
      %1618 = vmatprep.subr.bf16.mxu0 0
      %1619 = vmatpush1.bf16.msra.mxu0 0
      %1620 = vmatprep.subr.bf16.mxu0 0
      %1621 = vmatpush1.bf16.msra.mxu0 0
      %1622 = vmatprep.subr.bf16.mxu0 0
      %1623 = vmatpush1.bf16.msra.mxu0 0
      %1624 = vmatprep.subr.bf16.mxu0 0
      %1625 = vmatpush1.bf16.msra.mxu0 0
      %1626 = vmatprep.subr.bf16.mxu0 0
      %1627 = vmatpush1.bf16.msra.mxu0 0
      %1628 = vmatprep.subr.bf16.mxu0 0
      %1629 = vmatpush1.bf16.msra.mxu0 0
      %1630 = vmatprep.mubr.bf16.mxu0 0
      %1631 = vmatmul.mubr.bf16.gmra.mrb[0].mxu0 %v1596
      %v1632 = vpop.f32.mrb[0].mxu0
      %v1633 = vadd.f32 %v1548, %v1632
      %v1634 = vpop.f32.mrb[0].mxu0
      %v1635 = vadd.f32 %v1552, %v1634
      %v1636 = vpop.f32.mrb[0].mxu0
      %v1637 = vadd.f32 %v1548, %v1636
      %v1638 = vpop.f32.mrb[0].mxu0
      %v1639 = vadd.f32 %v1552, %v1638
      %1640 = vdwg.mxu0
      %v1641 = vmul.f32 %v1633, 0.5
      %v1642 = vmul.f32 %v1635, 0.5
      %v1643 = vmul.f32 %v1637, 0.5
      %v1644 = vmul.f32 %v1639, 0.5
      %v1645 = vmul.f32 %v1633, 0.044715
      %v1646 = vmul.f32 %v1635, 0.044715
      %v1647 = vmul.f32 %v1637, 0.044715
      %v1648 = vmul.f32 %v1639, 0.044715
      %v1649 = vmul.f32 %v1645, %v1633
      %v1650 = vmul.f32 %v1646, %v1635
      %v1651 = vmul.f32 %v1647, %v1637
      %v1652 = vmul.f32 %v1648, %v1639
      %v1653 = vmul.f32 %v1649, %v1633
      %v1654 = vmul.f32 %v1650, %v1635
      %v1655 = vmul.f32 %v1651, %v1637
      %v1656 = vmul.f32 %v1652, %v1639
      %v1657 = vadd.f32 %v1633, %v1653
      %v1658 = vadd.f32 %v1635, %v1654
      %v1659 = vadd.f32 %v1637, %v1655
      %v1660 = vadd.f32 %v1639, %v1656
      %v1661 = vmul.f32 %v1657, 0.7978846
      %v1662 = vmul.f32 %v1658, 0.7978846
      %v1663 = vmul.f32 %v1659, 0.7978846
      %v1664 = vmul.f32 %v1660, 0.7978846
      %v1665 = vtanh.pop %v1661
      %v1666 = vtanh.pop %v1662
      %v1667 = vtanh.pop %v1663
      %v1668 = vtanh.pop %v1664
      %v1669 = vadd.f32 %v1665, 1.0
      %v1670 = vadd.f32 %v1666, 1.0
      %v1671 = vadd.f32 %v1667, 1.0
      %v1672 = vadd.f32 %v1668, 1.0
      %v1673 = vmul.f32 %v1641, %v1669
      %v1674 = vmul.f32 %v1642, %v1670
      %v1675 = vmul.f32 %v1643, %v1671
      %v1676 = vmul.f32 %v1644, %v1672
      %v1677 = vpack.c.bf16 %v1675, %v1673
      %v1678 = vpack.c.bf16 %v1676, %v1674
      %v1679 = vld [vmem:[%s696] sm:$0xf]
      %v1680 = vld [vmem:[%s696 + $0x4] sm:$0xf]
      %v1681 = vld [vmem:[%s696 + $0x8] sm:$0xf]
      %v1682 = vld [vmem:[%s696 + $0xc] sm:$0xf]
      %v1683 = vld [vmem:[%s696 + $0x10] sm:$0xf]
      %v1684 = vld [vmem:[%s696 + $0x14] sm:$0xf]
      %v1685 = vld [vmem:[%s696 + $0x18] sm:$0xf]
      %v1686 = vld [vmem:[%s696 + $0x1c] sm:$0xf]
      %v1687 = vld [vmem:[%s696 + $0x20] sm:$0xf]
      %v1688 = vld [vmem:[%s696 + $0x24] sm:$0xf]
      %v1689 = vld [vmem:[%s696 + $0x28] sm:$0xf]
      %v1690 = vld [vmem:[%s696 + $0x2c] sm:$0xf]
      %v1691 = vld [vmem:[%s696 + $0x30] sm:$0xf]
      %v1692 = vld [vmem:[%s696 + $0x34] sm:$0xf]
      %v1693 = vld [vmem:[%s696 + $0x38] sm:$0xf]
      %v1694 = vld [vmem:[%s696 + $0x3c] sm:$0xf]
      %v1695 = vld [vmem:[%s696 + $0x40] sm:$0xf]
      %v1696 = vld [vmem:[%s696 + $0x44] sm:$0xf]
      %v1697 = vld [vmem:[%s696 + $0x48] sm:$0xf]
      %v1698 = vld [vmem:[%s696 + $0x4c] sm:$0xf]
      %v1699 = vld [vmem:[%s696 + $0x50] sm:$0xf]
      %v1700 = vld [vmem:[%s696 + $0x54] sm:$0xf]
      %v1701 = vld [vmem:[%s696 + $0x58] sm:$0xf]
      %v1702 = vld [vmem:[%s696 + $0x5c] sm:$0xf]
      %v1703 = vld [vmem:[%s696 + $0x60] sm:$0xf]
      %v1704 = vld [vmem:[%s696 + $0x64] sm:$0xf]
      %v1705 = vld [vmem:[%s696 + $0x68] sm:$0xf]
      %v1706 = vld [vmem:[%s696 + $0x6c] sm:$0xf]
      %v1707 = vld [vmem:[%s696 + $0x70] sm:$0xf]
      %v1708 = vld [vmem:[%s696 + $0x74] sm:$0xf]
      %v1709 = vld [vmem:[%s696 + $0x78] sm:$0xf]
      %v1710 = vld [vmem:[%s696 + $0x7c] sm:$0xf]
      %v1711 = vld [vmem:[%s699] sm:$0x1]
      %v1713 = vlaneseq
      %v1714 = vshrl.u32 %v1713, 7
      %v1715 = vsub.s32 0, %v1714
      %v1716 = vrot.slane %v1711, %v1715
      %v1750 = vunpack.c.l.b16 %v1679
      %v1751 = vunpack.c.l.b16 %v1680
      %v1752 = vunpack.c.l.b16 %v1681
      %v1753 = vunpack.c.l.b16 %v1682
      %v1754 = vunpack.c.l.b16 %v1683
      %v1755 = vunpack.c.l.b16 %v1684
      %v1756 = vunpack.c.l.b16 %v1685
      %v1757 = vunpack.c.l.b16 %v1686
      %v1758 = vunpack.c.l.b16 %v1687
      %v1759 = vunpack.c.l.b16 %v1688
      %v1760 = vunpack.c.l.b16 %v1689
      %v1761 = vunpack.c.l.b16 %v1690
      %v1762 = vunpack.c.l.b16 %v1691
      %v1763 = vunpack.c.l.b16 %v1692
      %v1764 = vunpack.c.l.b16 %v1693
      %v1765 = vunpack.c.l.b16 %v1694
      %v1766 = vunpack.c.l.b16 %v1695
      %v1767 = vunpack.c.l.b16 %v1696
      %v1768 = vunpack.c.l.b16 %v1697
      %v1769 = vunpack.c.l.b16 %v1698
      %v1770 = vunpack.c.l.b16 %v1699
      %v1771 = vunpack.c.l.b16 %v1700
      %v1772 = vunpack.c.l.b16 %v1701
      %v1773 = vunpack.c.l.b16 %v1702
      %v1774 = vunpack.c.l.b16 %v1703
      %v1775 = vunpack.c.l.b16 %v1704
      %v1776 = vunpack.c.l.b16 %v1705
      %v1777 = vunpack.c.l.b16 %v1706
      %v1778 = vunpack.c.l.b16 %v1707
      %v1779 = vunpack.c.l.b16 %v1708
      %v1780 = vunpack.c.l.b16 %v1709
      %v1781 = vunpack.c.l.b16 %v1710
      %v1782 = vpack.c.b16 %v1751, %v1750
      %v1783 = vpack.c.b16 %v1753, %v1752
      %v1784 = vpack.c.b16 %v1755, %v1754
      %v1785 = vpack.c.b16 %v1757, %v1756
      %v1786 = vpack.c.b16 %v1759, %v1758
      %v1787 = vpack.c.b16 %v1761, %v1760
      %v1788 = vpack.c.b16 %v1763, %v1762
      %v1789 = vpack.c.b16 %v1765, %v1764
      %v1790 = vpack.c.b16 %v1767, %v1766
      %v1791 = vpack.c.b16 %v1769, %v1768
      %v1792 = vpack.c.b16 %v1771, %v1770
      %v1793 = vpack.c.b16 %v1773, %v1772
      %v1794 = vpack.c.b16 %v1775, %v1774
      %v1795 = vpack.c.b16 %v1777, %v1776
      %v1796 = vpack.c.b16 %v1779, %v1778
      %v1797 = vpack.c.b16 %v1781, %v1780
      %1814 = vmatprep.subr.bf16.mxu0 0
      %1815 = vmatpush1.bf16.msra.mxu0 %v1782
      %1816 = vmatprep.subr.bf16.mxu0 0
      %1817 = vmatpush1.bf16.msra.mxu0 %v1783
      %1818 = vmatprep.subr.bf16.mxu0 0
      %1819 = vmatpush1.bf16.msra.mxu0 %v1784
      %1820 = vmatprep.subr.bf16.mxu0 0
      %1821 = vmatpush1.bf16.msra.mxu0 %v1785
      %1822 = vmatprep.subr.bf16.mxu0 0
      %1823 = vmatpush1.bf16.msra.mxu0 %v1786
      %1824 = vmatprep.subr.bf16.mxu0 0
      %1825 = vmatpush1.bf16.msra.mxu0 %v1787
      %1826 = vmatprep.subr.bf16.mxu0 0
      %1827 = vmatpush1.bf16.msra.mxu0 %v1788
      %1828 = vmatprep.subr.bf16.mxu0 0
      %1829 = vmatpush1.bf16.msra.mxu0 %v1789
      %1830 = vmatprep.subr.bf16.mxu0 0
      %1831 = vmatpush1.bf16.msra.mxu0 %v1790
      %1832 = vmatprep.subr.bf16.mxu0 0
      %1833 = vmatpush1.bf16.msra.mxu0 %v1791
      %1834 = vmatprep.subr.bf16.mxu0 0
      %1835 = vmatpush1.bf16.msra.mxu0 %v1792
      %1836 = vmatprep.subr.bf16.mxu0 0
      %1837 = vmatpush1.bf16.msra.mxu0 %v1793
      %1838 = vmatprep.subr.bf16.mxu0 0
      %1839 = vmatpush1.bf16.msra.mxu0 %v1794
      %1840 = vmatprep.subr.bf16.mxu0 0
      %1841 = vmatpush1.bf16.msra.mxu0 %v1795
      %1842 = vmatprep.subr.bf16.mxu0 0
      %1843 = vmatpush1.bf16.msra.mxu0 %v1796
      %1844 = vmatprep.subr.bf16.mxu0 0
      %1845 = vmatpush1.bf16.msra.mxu0 %v1797
      %1846 = vmatprep.mubr.bf16.mxu0 %v1678
      %1847 = vmatmul.mubr.bf16.gmra.mrb[0].mxu0 %v1677
      %v1848 = vpop.f32.mrb[0].mxu0
      %v1849 = vadd.f32 %v1716, %v1848
      %v1850 = vpop.f32.mrb[0].mxu0
      %v1851 = vpop.f32.mrb[0].mxu0
      %v1852 = vadd.f32 %v1716, %v1851
      %v1853 = vpop.f32.mrb[0].mxu0
      %1854 = vdwg.mxu0
      %v1855 = vadd.f32 %v1488, %v1849
      %v1856 = vadd.f32 %v1489, %v1852
      %1857 = vst.msk [vmem:[#allocation2] sm:$0xff] %vm719, %v1855
      %1858 = vst.msk [vmem:[#allocation2 + $0x8] sm:$0xff] %vm719, %v1856
      %p1859 = scmp.eq.s32.totalorder %s31, 1
      // Predicated region
      $region85: #{nano_gpt2_forward.2} parent=79 // pred_check
        %p1860 = pneg %p1859
      $region86: #{nano_gpt2_forward.2} parent=79 // pred_check_branch
        %1862 = sbr.rel (%p1860) target = $region88
      $region87: #{nano_gpt2_forward.2} parent=79 // pred_region
        %v1863 = vld [vmem:[%s13] sm:$0x1]
        %v1864 = vld [vmem:[%s14] sm:$0x1]
        %v1865 = vsel %vm719, %v1855, 0.0
        %1866 = vadd.xlane.f32.xlu0 %v1865
        %v1867 = vpop.xlane.xlu0 %1866
        %v1868 = vsel %vm719, %v1856, 0.0
        %1869 = vadd.xlane.f32.xlu0 %v1868
        %v1870 = vpop.xlane.xlu0 %1869
        %v1871 = vmul.f32 %v1867, %v726
        %v1872 = vmul.f32 %v1870, %v726
        %v1873 = vsub.f32 %v1855, %v1871
        %v1874 = vsub.f32 %v1856, %v1872
        %v1875 = vmul.f32 %v1873, %v1873
        %v1876 = vmul.f32 %v1874, %v1874
        %v1877 = vsel %vm719, %v1875, 0.0
        %1878 = vadd.xlane.f32.xlu0 %v1877
        %v1879 = vpop.xlane.xlu0 %1878
        %v1880 = vsel %vm719, %v1876, 0.0
        %1881 = vadd.xlane.f32.xlu0 %v1880
        %v1882 = vpop.xlane.xlu0 %1881
        %v1883 = vmul.f32 %v1879, %v726
        %v1884 = vmul.f32 %v1882, %v726
        %v1885 = vadd.f32 %v1883, 1e-05
        %v1886 = vadd.f32 %v1884, 1e-05
        %v1887 = vrsqrt.pop %v1885
        %v1888 = vrsqrt.pop %v1886
        %v1889 = vmul.f32 %v1873, %v1887
        %v1890 = vmul.f32 %v1874, %v1888
        %v1892 = vlaneseq
        %v1893 = vshrl.u32 %v1892, 7
        %v1894 = vsub.s32 0, %v1893
        %v1895 = vrot.slane %v1863, %v1894
        %v1897 = vmul.f32 %v1889, %v1895
        %v1898 = vmul.f32 %v1890, %v1895
        %v1900 = vlaneseq
        %v1901 = vshrl.u32 %v1900, 7
        %v1902 = vsub.s32 0, %v1901
        %v1903 = vrot.slane %v1864, %v1902
        %v1905 = vadd.f32 %v1897, %v1903
        %v1906 = vadd.f32 %v1898, %v1903
        %v1907 = vpack.c.bf16 %v1906, %v1905
        %v1909 = vunpack.c.l.b16 %v1907
        %v1910 = vunpack.c.h.b16 %v1907
        %v1911 = vpack.c.b16 %v1909, %v1909
        %v1912 = vpack.c.b16 %v1910, %v1910
        %vm1915 = vcmask 519168
        %1916 = vst.msk [vmem:[%s704] sm:$0xf] %vm1915, %v1911
        %1917 = vst.msk [vmem:[%s704 + $0x4] sm:$0xf] %vm1915, %v1912
      $region88: #{nano_gpt2_forward.2} parent=79 // pred_fallthru
        _
      %p1918 = scmp.lt.s32.totalorder %s30, 1
      %s1919 = scalar_select %p1918, %s30, 1
      %s1920 = smul.addr %s1919, 2
      %s1921 = smul.addr %s1920, 4
      %s1922 = scalar_lea.vmem %s15, %s1921
      // Predicated region
      $region89: #{nano_gpt2_forward.2} parent=79 // pred_check
        %p1923 = pneg %p436
      $region90: #{nano_gpt2_forward.2} parent=79 // pred_check_branch
        %1925 = sbr.rel (%p1923) target = $region92
      $region91: #{nano_gpt2_forward.2} parent=79 // pred_region
        _
      $region92: #{nano_gpt2_forward.2} parent=79 // pred_fallthru
        _
    $region80: #{nano_gpt2_forward.2} parent=5 // pred_fallthru
      _
    %p1926 = scmp.le.s32.totalorder 2, %s21
    // Predicated region
    $region93: #{nano_gpt2_forward.2} parent=5 // pred_check
      %p1927 = pneg %p1926
    $region94: #{nano_gpt2_forward.2} parent=5 // pred_check_branch
      %1929 = sbr.rel (%p1927) target = $region96
    $region95: #{nano_gpt2_forward.2} parent=5 // pred_region
      %s1930 = ssub.s32 %s21, 2
      // Predicated region
      $region97: #{nano_gpt2_forward.2} parent=95 // pred_check
        %p1931 = pneg %p442
      $region98: #{nano_gpt2_forward.2} parent=95 // pred_check_branch
        %1933 = sbr.rel (%p1931) target = $region100
      $region99: #{nano_gpt2_forward.2} parent=95 // pred_region
        %p1934 = scmp.lt.s32.totalorder %s32, 1
        %s1935 = scalar_select %p1934, %s32, 1
        %s1936 = smul.addr %s1935, 2
        %s1937 = smul.addr %s1936, 4
        %s1938 = scalar_lea.vmem %s15, %s1937
      $region100: #{nano_gpt2_forward.2} parent=95 // pred_fallthru
        _
    $region96: #{nano_gpt2_forward.2} parent=5 // pred_fallthru
      _
  $region6: #{nano_gpt2_forward.2} parent=0 // loop_footer
    %s25 = sadd.s32 1, %s21
  $region7: #{nano_gpt2_forward.2} parent=0 // loop_footer_branch
    %20 = sbr.rel target = $region3
  $region8: #{nano_gpt2_forward.2} parent=0 // loop_exit
    _

</llo_original>
